<compile_context>
chip_gen: v6e
topology: v6e:2x2x1
jax: 0.10.0
libtpu: 0.0.40
codegen_flags: <defaults>
</compile_context>

<pallas_src>
import functools
import string

import jax
import jax.numpy as jnp
from jax.experimental import pallas as pl
from jax.experimental.pallas import tpu as pltpu

# Operand dtype for the MXU matmuls.  float32 by default so the result matches
# the reference to 1e-4.  On v6e / v7x this can be flipped to jnp.bfloat16
# (accumulation stays f32 via preferred_element_type) for higher MXU
# throughput; loosen test tolerances accordingly.  Keep f32 elementwise on v5e.
MATMUL_DTYPE = jnp.float32

_VMEM = pl.BlockSpec(memory_space=pltpu.MemorySpace.VMEM)


def _round_up(n, m):
    return ((n + m - 1) // m) * m


# ---------------------------------------------------------------------------
# Fused Pallas kernel: all LSTM layers + FC head in one call
# ---------------------------------------------------------------------------
def _make_fused_kernel(num_layers: int, hidden: int):
    H = hidden

    def kernel(x_ref, h0_ref, c0_ref, *rest):
        # rest = [wih_t_0, whh_t_0, bias_0, ..., fc_w_t, fc_b,
        #         logits_ref, hT_ref, cT_ref, seq_scratch]
        nw = 3 * num_layers
        w_refs = rest[:nw]
        fc_w_ref = rest[nw]
        fc_b_ref = rest[nw + 1]
        logits_ref = rest[nw + 2]
        hT_ref = rest[nw + 3]
        cT_ref = rest[nw + 4]
        seq_ref = rest[nw + 5]          # VMEM scratch (T, Bp, H)

        T, Bp, _ = x_ref.shape

        # Lane mask selecting the "g" gate (lanes [2H, 3H)) of the packed
        # (i, f, g, o) pre-activations: lets us run ONE sigmoid pass over the
        # whole 4H-lane row and recover tanh via tanh(x) = 2*sigmoid(2x) - 1.
        lane = jax.lax.broadcasted_iota(jnp.int32, (Bp, 4 * H), 1)
        is_g = jnp.logical_and(lane >= 2 * H, lane < 3 * H)

        h = None
        for l in range(num_layers):
            wih_t = w_refs[3 * l][...].astype(MATMUL_DTYPE)      # (Din, 4H)
            whh_t = w_refs[3 * l + 1][...].astype(MATMUL_DTYPE)  # (H, 4H)
            bias = w_refs[3 * l + 2][...]                        # (1, 4H) f32

            if l == 0:
                xin = x_ref[...]        # (T, Bp, Dp)
            else:
                xin = seq_ref[...]      # (T, Bp, H) from previous layer
            din = xin.shape[-1]

            # Hoisted input projection + bias: one matmul outside the serial
            # recurrence instead of T tiny matmuls + bias broadcasts inside.
            gates_x = (
                jnp.dot(xin.reshape(T * Bp, din).astype(MATMUL_DTYPE), wih_t,
                        preferred_element_type=jnp.float32)
                + bias
            ).reshape(T, Bp, 4 * H)

            h = h0_ref[l]               # (Bp, H)
            c = c0_ref[l]               # (Bp, H)
            last_layer = (l == num_layers - 1)

            # Fully unrolled time loop (T static & small): the serial chain
            # per step is one (Bp,H)@(H,4H) matmul plus elementwise/EUP work.
            for t in range(T):
                gates = gates_x[t] + jnp.dot(
                    h.astype(MATMUL_DTYPE), whh_t,
                    preferred_element_type=jnp.float32)          # (Bp, 4H)
                z = jnp.where(is_g, 2.0 * gates, gates)
                s = jax.nn.sigmoid(z)
                act = jnp.where(is_g, 2.0 * s - 1.0, s)  # i, f, tanh(g), o
                i_g = act[:, 0 * H:1 * H]
                f_g = act[:, 1 * H:2 * H]
                g_g = act[:, 2 * H:3 * H]
                o_g = act[:, 3 * H:4 * H]
                c = f_g * c + i_g * g_g
                h = o_g * jnp.tanh(c)
                if not last_layer:
                    seq_ref[t] = h      # next layer's input sequence
                # last layer: sequence never stored (FC only needs h_T)

            hT_ref[l] = h
            cT_ref[l] = c

        # Fused fully-connected head on the last layer's final hidden state.
        logits_ref[...] = (
            jnp.dot(h.astype(MATMUL_DTYPE),
                    fc_w_ref[...].astype(MATMUL_DTYPE),
                    preferred_element_type=jnp.float32)
            + fc_b_ref[...]
        )

    return kernel


# ---------------------------------------------------------------------------
# One-time parameter preparation (pre-transpose + pad) — outside the kernel
# ---------------------------------------------------------------------------
def prepare_params(params):
    """PyTorch-layout params -> kernel-layout params.

    Wih (4H, Din) -> Wih^T (Din_padded, 4H)   (layer 0 input dim padded to 128)
    Whh (4H, H)   -> Whh^T (H, 4H)
    biases        -> combined (1, 4H)
    fc_w (V, H)   -> fc_w^T (H, V_padded)
    fc_b (V,)     -> (1, V_padded)
    """
    lstm = []
    for l, (wih, whh, bih, bhh) in enumerate(params["lstm"]):
        wih_t = wih.T                                    # (Din, 4H)
        if l == 0:
            din = wih_t.shape[0]
            dp = _round_up(din, 128)
            wih_t = jnp.pad(wih_t, ((0, dp - din), (0, 0)))
        whh_t = whh.T                                    # (H, 4H)
        bias = (bih + bhh)[None, :]                      # (1, 4H)
        lstm.append((wih_t, whh_t, bias))
    V, _ = params["fc_w"].shape
    vp = _round_up(V, 128)
    fc_w_t = jnp.pad(params["fc_w"].T, ((0, 0), (0, vp - V)))   # (H, Vp)
    fc_b = jnp.pad(params["fc_b"], (0, vp - V))[None, :]        # (1, Vp)
    return {"lstm": lstm, "fc_w_t": fc_w_t, "fc_b": fc_b}


# ---------------------------------------------------------------------------
# Forward wrapper (single fused pallas_call)
# ---------------------------------------------------------------------------
@functools.partial(jax.jit, static_argnames=("vocab_size",))
def text_generator_forward(x, prev_state, prepared, *, vocab_size):
    """x: (B, T, D) batch-first; prev_state: (h0, c0) each (L, B, H).

    Returns (logits (B, V), (h_n, c_n) each (L, B, H)) — same semantics as the
    PyTorch module's forward.
    """
    h0, c0 = prev_state
    L, B, H = h0.shape
    _, T, D = x.shape
    V = vocab_size
    Vp = prepared["fc_w_t"].shape[1]
    Dp = prepared["lstm"][0][0].shape[0]
    Bp = _round_up(max(B, 8), 8)        # full 8-sublane vregs

    # time-major + zero padding (batch -> 8 sublanes, input -> 128 lanes)
    x_tm = jnp.transpose(x, (1, 0, 2))                          # (T, B, D)
    x_tm = jnp.pad(x_tm, ((0, 0), (0, Bp - B), (0, Dp - D)))
    h0p = jnp.pad(h0, ((0, 0), (0, Bp - B), (0, 0)))
    c0p = jnp.pad(c0, ((0, 0), (0, Bp - B), (0, 0)))

    w_args = []
    for wih_t, whh_t, bias in prepared["lstm"]:
        w_args += [wih_t, whh_t, bias]

    n_in = 3 + len(w_args) + 2
    kernel = _make_fused_kernel(L, H)

    logits_p, hT_p, cT_p = pl.pallas_call(
        kernel,
        out_shape=(
            jax.ShapeDtypeStruct((Bp, Vp), jnp.float32),        # logits
            jax.ShapeDtypeStruct((L, Bp, H), jnp.float32),      # h_n
            jax.ShapeDtypeStruct((L, Bp, H), jnp.float32),      # c_n
        ),
        in_specs=[_VMEM] * n_in,
        out_specs=(_VMEM, _VMEM, _VMEM),
        scratch_shapes=[pltpu.VMEM((T, Bp, H), jnp.float32)],
    )(x_tm, h0p, c0p, *w_args, prepared["fc_w_t"], prepared["fc_b"])

    logits = logits_p[:B, :V]
    return logits, (hT_p[:, :B, :], cT_p[:, :B, :])


# ---------------------------------------------------------------------------
# Pure-JAX reference (for correctness check)
# ---------------------------------------------------------------------------
def _ref_forward(x, prev_state, params):
    h0, c0 = prev_state
    num_layers = h0.shape[0]
    seq = x
    h_out, c_out = [], []
    for l in range(num_layers):
        wih, whh, bih, bhh = params["lstm"][l]
        H = whh.shape[1]
        h, c = h0[l], c0[l]
        ys = []
        for t in range(seq.shape[1]):
            gates = seq[:, t, :] @ wih.T + bih + h @ whh.T + bhh
            i = jax.nn.sigmoid(gates[:, :H])
            f = jax.nn.sigmoid(gates[:, H:2 * H])
            g = jnp.tanh(gates[:, 2 * H:3 * H])
            o = jax.nn.sigmoid(gates[:, 3 * H:])
            c = f * c + i * g
            h = o * jnp.tanh(c)
            ys.append(h)
        seq = jnp.stack(ys, axis=1)
        h_out.append(h)
        c_out.append(c)
    logits = seq[:, -1, :] @ params["fc_w"].T + params["fc_b"]
    return logits, (jnp.stack(h_out), jnp.stack(c_out))


# ---------------------------------------------------------------------------
# Deterministic parameter init (mimics nn.LSTM / nn.Linear shapes & layout)
# ---------------------------------------------------------------------------
def init_params(key, input_size, hidden_size, num_layers, vocab_size):
    params = {"lstm": []}
    k = 1.0 / jnp.sqrt(hidden_size)
    for l in range(num_layers):
        d_in = input_size if l == 0 else hidden_size
        key, k1, k2, k3, k4 = jax.random.split(key, 5)
        wih = jax.random.uniform(k1, (4 * hidden_size, d_in),
                                 jnp.float32, -k, k)
        whh = jax.random.uniform(k2, (4 * hidden_size, hidden_size),
                                 jnp.float32, -k, k)
        bih = jax.random.uniform(k3, (4 * hidden_size,), jnp.float32, -k, k)
        bhh = jax.random.uniform(k4, (4 * hidden_size,), jnp.float32, -k, k)
        params["lstm"].append((wih, whh, bih, bhh))
    key, k5, k6 = jax.random.split(key, 3)
    params["fc_w"] = jax.random.uniform(k5, (vocab_size, hidden_size),
                                        jnp.float32, -k, k)
    params["fc_b"] = jax.random.uniform(k6, (vocab_size,), jnp.float32, -k, k)
    return params


# ---------------------------------------------------------------------------
if __name__ == "__main__":
    # Vocabulary exactly as in the PyTorch module
    all_letters = list(string.ascii_letters + " .,;'-") + ["<eos>"]
    VOCAB = len(all_letters)          # 59

    BATCH = 2
    SEQ_LEN = 8
    INPUT_SIZE = VOCAB                # empty_dataset_state.size(2)
    HIDDEN = 32
    NUM_LAYERS = 2

    key = jax.random.PRNGKey(0)
    key, kx = jax.random.split(key)
    x = jax.random.normal(kx, (BATCH, SEQ_LEN, INPUT_SIZE), jnp.float32)

    # init_state(): zero-filled h0 / c0
    h0 = jnp.zeros((NUM_LAYERS, BATCH, HIDDEN), jnp.float32)
    c0 = jnp.zeros((NUM_LAYERS, BATCH, HIDDEN), jnp.float32)

    params = init_params(key, INPUT_SIZE, HIDDEN, NUM_LAYERS, VOCAB)
    prepared = prepare_params(params)        # pre-transpose / pad once

    logits, (h_n, c_n) = text_generator_forward(
        x, (h0, c0), prepared, vocab_size=VOCAB)
    jax.block_until_ready((logits, h_n, c_n))

    # Verify against pure-JAX reference (PyTorch semantics)
    ref_logits, (ref_h, ref_c) = _ref_forward(x, (h0, c0), params)
    assert logits.shape == (BATCH, VOCAB)
    assert h_n.shape == (NUM_LAYERS, BATCH, HIDDEN)
    assert c_n.shape == (NUM_LAYERS, BATCH, HIDDEN)
    assert jnp.allclose(logits, ref_logits, atol=1e-4, rtol=1e-4)
    assert jnp.allclose(h_n, ref_h, atol=1e-4, rtol=1e-4)
    assert jnp.allclose(c_n, ref_c, atol=1e-4, rtol=1e-4)

    print("KERNEL_OK")
</pallas_src>

<mosaic_0001>
module attributes {stable_mosaic.version = 11 : i64} {
  func.func @kernel(%arg0: memref<8x8x128xf32, #tpu.memory_space<vmem>>, %arg1: memref<2x8x32xf32, #tpu.memory_space<vmem>>, %arg2: memref<2x8x32xf32, #tpu.memory_space<vmem>>, %arg3: memref<128x128xf32, #tpu.memory_space<vmem>>, %arg4: memref<32x128xf32, #tpu.memory_space<vmem>>, %arg5: memref<1x128xf32, #tpu.memory_space<vmem>>, %arg6: memref<32x128xf32, #tpu.memory_space<vmem>>, %arg7: memref<32x128xf32, #tpu.memory_space<vmem>>, %arg8: memref<1x128xf32, #tpu.memory_space<vmem>>, %arg9: memref<32x128xf32, #tpu.memory_space<vmem>>, %arg10: memref<1x128xf32, #tpu.memory_space<vmem>>, %arg11: memref<8x128xf32, #tpu.memory_space<vmem>>, %arg12: memref<2x8x32xf32, #tpu.memory_space<vmem>>, %arg13: memref<2x8x32xf32, #tpu.memory_space<vmem>>, %arg14: memref<8x8x32xf32, #tpu.memory_space<vmem>>) attributes {dimension_semantics = [], scalar_prefetch = 0 : i64, scratch_operands = 1 : i64, tpu.core_type = #tpu.core_type<tc>} {
    %0 = tpu.iota {dimensions = array<i32: 1>} : vector<8x128xi32>
    %c64_i32 = arith.constant 64 : i32
    %1 = vector.broadcast %c64_i32 : i32 to vector<8x128xi32>
    %2 = arith.cmpi sge, %0, %1 : vector<8x128xi32>
    %c96_i32 = arith.constant 96 : i32
    %3 = vector.broadcast %c96_i32 : i32 to vector<8x128xi32>
    %4 = arith.cmpi slt, %0, %3 : vector<8x128xi32>
    %5 = arith.andi %2, %4 : vector<8x128xi1>
    %c0 = arith.constant 0 : index
    %c0_0 = arith.constant 0 : index
    %6 = vector.load %arg3[%c0, %c0_0] : memref<128x128xf32, #tpu.memory_space<vmem>>, vector<128x128xf32>
    %c0_1 = arith.constant 0 : index
    %c0_2 = arith.constant 0 : index
    %7 = vector.load %arg4[%c0_1, %c0_2] : memref<32x128xf32, #tpu.memory_space<vmem>>, vector<32x128xf32>
    %c0_3 = arith.constant 0 : index
    %c0_4 = arith.constant 0 : index
    %8 = vector.load %arg5[%c0_3, %c0_4] : memref<1x128xf32, #tpu.memory_space<vmem>>, vector<1x128xf32>
    %c0_5 = arith.constant 0 : index
    %c0_6 = arith.constant 0 : index
    %c0_7 = arith.constant 0 : index
    %9 = vector.load %arg0[%c0_5, %c0_6, %c0_7] : memref<8x8x128xf32, #tpu.memory_space<vmem>>, vector<8x8x128xf32>
    %10 = vector.shape_cast %9 : vector<8x8x128xf32> to vector<64x128xf32>
    %cst = arith.constant dense<0.000000e+00> : vector<64x128xf32>
    %11 = tpu.matmul %10, %6, %cst {dimension_numbers = #tpu.dot_dimension_numbers<[1], [0], [0], [1], [0, 0, 1, 1], [], []>} : vector<64x128xf32>, vector<128x128xf32>, vector<64x128xf32> -> vector<64x128xf32>
    %12 = vector.broadcast %8 : vector<1x128xf32> to vector<64x128xf32>
    %13 = arith.addf %11, %12 : vector<64x128xf32>
    %14 = vector.shape_cast %13 : vector<64x128xf32> to vector<8x8x128xf32>
    %c0_8 = arith.constant 0 : index
    %c0_9 = arith.constant 0 : index
    %c0_10 = arith.constant 0 : index
    %15 = vector.load %arg1[%c0_8, %c0_9, %c0_10] : memref<2x8x32xf32, #tpu.memory_space<vmem>>, vector<1x8x32xf32>
    %16 = vector.shape_cast %15 : vector<1x8x32xf32> to vector<8x32xf32>
    %c0_11 = arith.constant 0 : index
    %c0_12 = arith.constant 0 : index
    %c0_13 = arith.constant 0 : index
    %17 = vector.load %arg2[%c0_11, %c0_12, %c0_13] : memref<2x8x32xf32, #tpu.memory_space<vmem>>, vector<1x8x32xf32>
    %18 = vector.shape_cast %17 : vector<1x8x32xf32> to vector<8x32xf32>
    %19 = vector.extract_strided_slice %14 {offsets = [0, 0, 0], sizes = [1, 8, 128], strides = [1, 1, 1]} : vector<8x8x128xf32> to vector<1x8x128xf32>
    %20 = vector.shape_cast %19 : vector<1x8x128xf32> to vector<8x128xf32>
    %cst_14 = arith.constant dense<0.000000e+00> : vector<8x128xf32>
    %21 = tpu.matmul %16, %7, %cst_14 {dimension_numbers = #tpu.dot_dimension_numbers<[1], [0], [0], [1], [0, 0, 1, 1], [], []>} : vector<8x32xf32>, vector<32x128xf32>, vector<8x128xf32> -> vector<8x128xf32>
    %22 = arith.addf %20, %21 : vector<8x128xf32>
    %cst_15 = arith.constant 2.000000e+00 : f32
    %23 = vector.broadcast %cst_15 : f32 to vector<8x128xf32>
    %24 = arith.mulf %23, %22 : vector<8x128xf32>
    %25 = arith.select %5, %24, %22 : vector<8x128xi1>, vector<8x128xf32>
    %26 = arith.negf %25 : vector<8x128xf32>
    %27 = math.exp %26 : vector<8x128xf32>
    %cst_16 = arith.constant 1.000000e+00 : f32
    %28 = vector.broadcast %cst_16 : f32 to vector<8x128xf32>
    %29 = arith.addf %28, %27 : vector<8x128xf32>
    %30 = arith.divf %28, %29 : vector<8x128xf32>
    %cst_17 = arith.constant 2.000000e+00 : f32
    %31 = vector.broadcast %cst_17 : f32 to vector<8x128xf32>
    %32 = arith.mulf %31, %30 : vector<8x128xf32>
    %cst_18 = arith.constant 1.000000e+00 : f32
    %33 = vector.broadcast %cst_18 : f32 to vector<8x128xf32>
    %34 = arith.subf %32, %33 : vector<8x128xf32>
    %35 = arith.select %5, %34, %30 : vector<8x128xi1>, vector<8x128xf32>
    %36 = vector.extract_strided_slice %35 {offsets = [0, 0], sizes = [8, 32], strides = [1, 1]} : vector<8x128xf32> to vector<8x32xf32>
    %37 = vector.extract_strided_slice %35 {offsets = [0, 32], sizes = [8, 32], strides = [1, 1]} : vector<8x128xf32> to vector<8x32xf32>
    %38 = vector.extract_strided_slice %35 {offsets = [0, 64], sizes = [8, 32], strides = [1, 1]} : vector<8x128xf32> to vector<8x32xf32>
    %39 = vector.extract_strided_slice %35 {offsets = [0, 96], sizes = [8, 32], strides = [1, 1]} : vector<8x128xf32> to vector<8x32xf32>
    %40 = arith.mulf %37, %18 : vector<8x32xf32>
    %41 = arith.mulf %36, %38 : vector<8x32xf32>
    %42 = arith.addf %40, %41 : vector<8x32xf32>
    %43 = math.tanh %42 : vector<8x32xf32>
    %44 = arith.mulf %39, %43 : vector<8x32xf32>
    %c0_19 = arith.constant 0 : index
    %c0_20 = arith.constant 0 : index
    %c0_21 = arith.constant 0 : index
    %45 = vector.load %arg14[%c0_19, %c0_20, %c0_21] : memref<8x8x32xf32, #tpu.memory_space<vmem>>, vector<1x8x32xf32>
    %46 = vector.shape_cast %45 : vector<1x8x32xf32> to vector<8x32xf32>
    %47 = vector.shape_cast %44 : vector<8x32xf32> to vector<1x8x32xf32>
    tpu.vector_store %arg14[%c0_19, %c0_20, %c0_21], %47 {strides = array<i32>} : memref<8x8x32xf32, #tpu.memory_space<vmem>>, vector<1x8x32xf32>,
    %48 = vector.extract_strided_slice %14 {offsets = [1, 0, 0], sizes = [1, 8, 128], strides = [1, 1, 1]} : vector<8x8x128xf32> to vector<1x8x128xf32>
    %49 = vector.shape_cast %48 : vector<1x8x128xf32> to vector<8x128xf32>
    %cst_22 = arith.constant dense<0.000000e+00> : vector<8x128xf32>
    %50 = tpu.matmul %44, %7, %cst_22 {dimension_numbers = #tpu.dot_dimension_numbers<[1], [0], [0], [1], [0, 0, 1, 1], [], []>} : vector<8x32xf32>, vector<32x128xf32>, vector<8x128xf32> -> vector<8x128xf32>
    %51 = arith.addf %49, %50 : vector<8x128xf32>
    %cst_23 = arith.constant 2.000000e+00 : f32
    %52 = vector.broadcast %cst_23 : f32 to vector<8x128xf32>
    %53 = arith.mulf %52, %51 : vector<8x128xf32>
    %54 = arith.select %5, %53, %51 : vector<8x128xi1>, vector<8x128xf32>
    %55 = arith.negf %54 : vector<8x128xf32>
    %56 = math.exp %55 : vector<8x128xf32>
    %cst_24 = arith.constant 1.000000e+00 : f32
    %57 = vector.broadcast %cst_24 : f32 to vector<8x128xf32>
    %58 = arith.addf %57, %56 : vector<8x128xf32>
    %59 = arith.divf %57, %58 : vector<8x128xf32>
    %cst_25 = arith.constant 2.000000e+00 : f32
    %60 = vector.broadcast %cst_25 : f32 to vector<8x128xf32>
    %61 = arith.mulf %60, %59 : vector<8x128xf32>
    %cst_26 = arith.constant 1.000000e+00 : f32
    %62 = vector.broadcast %cst_26 : f32 to vector<8x128xf32>
    %63 = arith.subf %61, %62 : vector<8x128xf32>
    %64 = arith.select %5, %63, %59 : vector<8x128xi1>, vector<8x128xf32>
    %65 = vector.extract_strided_slice %64 {offsets = [0, 0], sizes = [8, 32], strides = [1, 1]} : vector<8x128xf32> to vector<8x32xf32>
    %66 = vector.extract_strided_slice %64 {offsets = [0, 32], sizes = [8, 32], strides = [1, 1]} : vector<8x128xf32> to vector<8x32xf32>
    %67 = vector.extract_strided_slice %64 {offsets = [0, 64], sizes = [8, 32], strides = [1, 1]} : vector<8x128xf32> to vector<8x32xf32>
    %68 = vector.extract_strided_slice %64 {offsets = [0, 96], sizes = [8, 32], strides = [1, 1]} : vector<8x128xf32> to vector<8x32xf32>
    %69 = arith.mulf %66, %42 : vector<8x32xf32>
    %70 = arith.mulf %65, %67 : vector<8x32xf32>
    %71 = arith.addf %69, %70 : vector<8x32xf32>
    %72 = math.tanh %71 : vector<8x32xf32>
    %73 = arith.mulf %68, %72 : vector<8x32xf32>
    %c1 = arith.constant 1 : index
    %c0_27 = arith.constant 0 : index
    %c0_28 = arith.constant 0 : index
    %74 = vector.load %arg14[%c1, %c0_27, %c0_28] : memref<8x8x32xf32, #tpu.memory_space<vmem>>, vector<1x8x32xf32>
    %75 = vector.shape_cast %74 : vector<1x8x32xf32> to vector<8x32xf32>
    %76 = vector.shape_cast %73 : vector<8x32xf32> to vector<1x8x32xf32>
    tpu.vector_store %arg14[%c1, %c0_27, %c0_28], %76 {strides = array<i32>} : memref<8x8x32xf32, #tpu.memory_space<vmem>>, vector<1x8x32xf32>,
    %77 = vector.extract_strided_slice %14 {offsets = [2, 0, 0], sizes = [1, 8, 128], strides = [1, 1, 1]} : vector<8x8x128xf32> to vector<1x8x128xf32>
    %78 = vector.shape_cast %77 : vector<1x8x128xf32> to vector<8x128xf32>
    %cst_29 = arith.constant dense<0.000000e+00> : vector<8x128xf32>
    %79 = tpu.matmul %73, %7, %cst_29 {dimension_numbers = #tpu.dot_dimension_numbers<[1], [0], [0], [1], [0, 0, 1, 1], [], []>} : vector<8x32xf32>, vector<32x128xf32>, vector<8x128xf32> -> vector<8x128xf32>
    %80 = arith.addf %78, %79 : vector<8x128xf32>
    %cst_30 = arith.constant 2.000000e+00 : f32
    %81 = vector.broadcast %cst_30 : f32 to vector<8x128xf32>
    %82 = arith.mulf %81, %80 : vector<8x128xf32>
    %83 = arith.select %5, %82, %80 : vector<8x128xi1>, vector<8x128xf32>
    %84 = arith.negf %83 : vector<8x128xf32>
    %85 = math.exp %84 : vector<8x128xf32>
    %cst_31 = arith.constant 1.000000e+00 : f32
    %86 = vector.broadcast %cst_31 : f32 to vector<8x128xf32>
    %87 = arith.addf %86, %85 : vector<8x128xf32>
    %88 = arith.divf %86, %87 : vector<8x128xf32>
    %cst_32 = arith.constant 2.000000e+00 : f32
    %89 = vector.broadcast %cst_32 : f32 to vector<8x128xf32>
    %90 = arith.mulf %89, %88 : vector<8x128xf32>
    %cst_33 = arith.constant 1.000000e+00 : f32
    %91 = vector.broadcast %cst_33 : f32 to vector<8x128xf32>
    %92 = arith.subf %90, %91 : vector<8x128xf32>
    %93 = arith.select %5, %92, %88 : vector<8x128xi1>, vector<8x128xf32>
    %94 = vector.extract_strided_slice %93 {offsets = [0, 0], sizes = [8, 32], strides = [1, 1]} : vector<8x128xf32> to vector<8x32xf32>
    %95 = vector.extract_strided_slice %93 {offsets = [0, 32], sizes = [8, 32], strides = [1, 1]} : vector<8x128xf32> to vector<8x32xf32>
    %96 = vector.extract_strided_slice %93 {offsets = [0, 64], sizes = [8, 32], strides = [1, 1]} : vector<8x128xf32> to vector<8x32xf32>
    %97 = vector.extract_strided_slice %93 {offsets = [0, 96], sizes = [8, 32], strides = [1, 1]} : vector<8x128xf32> to vector<8x32xf32>
    %98 = arith.mulf %95, %71 : vector<8x32xf32>
    %99 = arith.mulf %94, %96 : vector<8x32xf32>
    %100 = arith.addf %98, %99 : vector<8x32xf32>
    %101 = math.tanh %100 : vector<8x32xf32>
    %102 = arith.mulf %97, %101 : vector<8x32xf32>
    %c2 = arith.constant 2 : index
    %c0_34 = arith.constant 0 : index
    %c0_35 = arith.constant 0 : index
    %103 = vector.load %arg14[%c2, %c0_34, %c0_35] : memref<8x8x32xf32, #tpu.memory_space<vmem>>, vector<1x8x32xf32>
    %104 = vector.shape_cast %103 : vector<1x8x32xf32> to vector<8x32xf32>
    %105 = vector.shape_cast %102 : vector<8x32xf32> to vector<1x8x32xf32>
    tpu.vector_store %arg14[%c2, %c0_34, %c0_35], %105 {strides = array<i32>} : memref<8x8x32xf32, #tpu.memory_space<vmem>>, vector<1x8x32xf32>,
    %106 = vector.extract_strided_slice %14 {offsets = [3, 0, 0], sizes = [1, 8, 128], strides = [1, 1, 1]} : vector<8x8x128xf32> to vector<1x8x128xf32>
    %107 = vector.shape_cast %106 : vector<1x8x128xf32> to vector<8x128xf32>
    %cst_36 = arith.constant dense<0.000000e+00> : vector<8x128xf32>
    %108 = tpu.matmul %102, %7, %cst_36 {dimension_numbers = #tpu.dot_dimension_numbers<[1], [0], [0], [1], [0, 0, 1, 1], [], []>} : vector<8x32xf32>, vector<32x128xf32>, vector<8x128xf32> -> vector<8x128xf32>
    %109 = arith.addf %107, %108 : vector<8x128xf32>
    %cst_37 = arith.constant 2.000000e+00 : f32
    %110 = vector.broadcast %cst_37 : f32 to vector<8x128xf32>
    %111 = arith.mulf %110, %109 : vector<8x128xf32>
    %112 = arith.select %5, %111, %109 : vector<8x128xi1>, vector<8x128xf32>
    %113 = arith.negf %112 : vector<8x128xf32>
    %114 = math.exp %113 : vector<8x128xf32>
    %cst_38 = arith.constant 1.000000e+00 : f32
    %115 = vector.broadcast %cst_38 : f32 to vector<8x128xf32>
    %116 = arith.addf %115, %114 : vector<8x128xf32>
    %117 = arith.divf %115, %116 : vector<8x128xf32>
    %cst_39 = arith.constant 2.000000e+00 : f32
    %118 = vector.broadcast %cst_39 : f32 to vector<8x128xf32>
    %119 = arith.mulf %118, %117 : vector<8x128xf32>
    %cst_40 = arith.constant 1.000000e+00 : f32
    %120 = vector.broadcast %cst_40 : f32 to vector<8x128xf32>
    %121 = arith.subf %119, %120 : vector<8x128xf32>
    %122 = arith.select %5, %121, %117 : vector<8x128xi1>, vector<8x128xf32>
    %123 = vector.extract_strided_slice %122 {offsets = [0, 0], sizes = [8, 32], strides = [1, 1]} : vector<8x128xf32> to vector<8x32xf32>
    %124 = vector.extract_strided_slice %122 {offsets = [0, 32], sizes = [8, 32], strides = [1, 1]} : vector<8x128xf32> to vector<8x32xf32>
    %125 = vector.extract_strided_slice %122 {offsets = [0, 64], sizes = [8, 32], strides = [1, 1]} : vector<8x128xf32> to vector<8x32xf32>
    %126 = vector.extract_strided_slice %122 {offsets = [0, 96], sizes = [8, 32], strides = [1, 1]} : vector<8x128xf32> to vector<8x32xf32>
    %127 = arith.mulf %124, %100 : vector<8x32xf32>
    %128 = arith.mulf %123, %125 : vector<8x32xf32>
    %129 = arith.addf %127, %128 : vector<8x32xf32>
    %130 = math.tanh %129 : vector<8x32xf32>
    %131 = arith.mulf %126, %130 : vector<8x32xf32>
    %c3 = arith.constant 3 : index
    %c0_41 = arith.constant 0 : index
    %c0_42 = arith.constant 0 : index
    %132 = vector.load %arg14[%c3, %c0_41, %c0_42] : memref<8x8x32xf32, #tpu.memory_space<vmem>>, vector<1x8x32xf32>
    %133 = vector.shape_cast %132 : vector<1x8x32xf32> to vector<8x32xf32>
    %134 = vector.shape_cast %131 : vector<8x32xf32> to vector<1x8x32xf32>
    tpu.vector_store %arg14[%c3, %c0_41, %c0_42], %134 {strides = array<i32>} : memref<8x8x32xf32, #tpu.memory_space<vmem>>, vector<1x8x32xf32>,
    %135 = vector.extract_strided_slice %14 {offsets = [4, 0, 0], sizes = [1, 8, 128], strides = [1, 1, 1]} : vector<8x8x128xf32> to vector<1x8x128xf32>
    %136 = vector.shape_cast %135 : vector<1x8x128xf32> to vector<8x128xf32>
    %cst_43 = arith.constant dense<0.000000e+00> : vector<8x128xf32>
    %137 = tpu.matmul %131, %7, %cst_43 {dimension_numbers = #tpu.dot_dimension_numbers<[1], [0], [0], [1], [0, 0, 1, 1], [], []>} : vector<8x32xf32>, vector<32x128xf32>, vector<8x128xf32> -> vector<8x128xf32>
    %138 = arith.addf %136, %137 : vector<8x128xf32>
    %cst_44 = arith.constant 2.000000e+00 : f32
    %139 = vector.broadcast %cst_44 : f32 to vector<8x128xf32>
    %140 = arith.mulf %139, %138 : vector<8x128xf32>
    %141 = arith.select %5, %140, %138 : vector<8x128xi1>, vector<8x128xf32>
    %142 = arith.negf %141 : vector<8x128xf32>
    %143 = math.exp %142 : vector<8x128xf32>
    %cst_45 = arith.constant 1.000000e+00 : f32
    %144 = vector.broadcast %cst_45 : f32 to vector<8x128xf32>
    %145 = arith.addf %144, %143 : vector<8x128xf32>
    %146 = arith.divf %144, %145 : vector<8x128xf32>
    %cst_46 = arith.constant 2.000000e+00 : f32
    %147 = vector.broadcast %cst_46 : f32 to vector<8x128xf32>
    %148 = arith.mulf %147, %146 : vector<8x128xf32>
    %cst_47 = arith.constant 1.000000e+00 : f32
    %149 = vector.broadcast %cst_47 : f32 to vector<8x128xf32>
    %150 = arith.subf %148, %149 : vector<8x128xf32>
    %151 = arith.select %5, %150, %146 : vector<8x128xi1>, vector<8x128xf32>
    %152 = vector.extract_strided_slice %151 {offsets = [0, 0], sizes = [8, 32], strides = [1, 1]} : vector<8x128xf32> to vector<8x32xf32>
    %153 = vector.extract_strided_slice %151 {offsets = [0, 32], sizes = [8, 32], strides = [1, 1]} : vector<8x128xf32> to vector<8x32xf32>
    %154 = vector.extract_strided_slice %151 {offsets = [0, 64], sizes = [8, 32], strides = [1, 1]} : vector<8x128xf32> to vector<8x32xf32>
    %155 = vector.extract_strided_slice %151 {offsets = [0, 96], sizes = [8, 32], strides = [1, 1]} : vector<8x128xf32> to vector<8x32xf32>
    %156 = arith.mulf %153, %129 : vector<8x32xf32>
    %157 = arith.mulf %152, %154 : vector<8x32xf32>
    %158 = arith.addf %156, %157 : vector<8x32xf32>
    %159 = math.tanh %158 : vector<8x32xf32>
    %160 = arith.mulf %155, %159 : vector<8x32xf32>
    %c4 = arith.constant 4 : index
    %c0_48 = arith.constant 0 : index
    %c0_49 = arith.constant 0 : index
    %161 = vector.load %arg14[%c4, %c0_48, %c0_49] : memref<8x8x32xf32, #tpu.memory_space<vmem>>, vector<1x8x32xf32>
    %162 = vector.shape_cast %161 : vector<1x8x32xf32> to vector<8x32xf32>
    %163 = vector.shape_cast %160 : vector<8x32xf32> to vector<1x8x32xf32>
    tpu.vector_store %arg14[%c4, %c0_48, %c0_49], %163 {strides = array<i32>} : memref<8x8x32xf32, #tpu.memory_space<vmem>>, vector<1x8x32xf32>,
    %164 = vector.extract_strided_slice %14 {offsets = [5, 0, 0], sizes = [1, 8, 128], strides = [1, 1, 1]} : vector<8x8x128xf32> to vector<1x8x128xf32>
    %165 = vector.shape_cast %164 : vector<1x8x128xf32> to vector<8x128xf32>
    %cst_50 = arith.constant dense<0.000000e+00> : vector<8x128xf32>
    %166 = tpu.matmul %160, %7, %cst_50 {dimension_numbers = #tpu.dot_dimension_numbers<[1], [0], [0], [1], [0, 0, 1, 1], [], []>} : vector<8x32xf32>, vector<32x128xf32>, vector<8x128xf32> -> vector<8x128xf32>
    %167 = arith.addf %165, %166 : vector<8x128xf32>
    %cst_51 = arith.constant 2.000000e+00 : f32
    %168 = vector.broadcast %cst_51 : f32 to vector<8x128xf32>
    %169 = arith.mulf %168, %167 : vector<8x128xf32>
    %170 = arith.select %5, %169, %167 : vector<8x128xi1>, vector<8x128xf32>
    %171 = arith.negf %170 : vector<8x128xf32>
    %172 = math.exp %171 : vector<8x128xf32>
    %cst_52 = arith.constant 1.000000e+00 : f32
    %173 = vector.broadcast %cst_52 : f32 to vector<8x128xf32>
    %174 = arith.addf %173, %172 : vector<8x128xf32>
    %175 = arith.divf %173, %174 : vector<8x128xf32>
    %cst_53 = arith.constant 2.000000e+00 : f32
    %176 = vector.broadcast %cst_53 : f32 to vector<8x128xf32>
    %177 = arith.mulf %176, %175 : vector<8x128xf32>
    %cst_54 = arith.constant 1.000000e+00 : f32
    %178 = vector.broadcast %cst_54 : f32 to vector<8x128xf32>
    %179 = arith.subf %177, %178 : vector<8x128xf32>
    %180 = arith.select %5, %179, %175 : vector<8x128xi1>, vector<8x128xf32>
    %181 = vector.extract_strided_slice %180 {offsets = [0, 0], sizes = [8, 32], strides = [1, 1]} : vector<8x128xf32> to vector<8x32xf32>
    %182 = vector.extract_strided_slice %180 {offsets = [0, 32], sizes = [8, 32], strides = [1, 1]} : vector<8x128xf32> to vector<8x32xf32>
    %183 = vector.extract_strided_slice %180 {offsets = [0, 64], sizes = [8, 32], strides = [1, 1]} : vector<8x128xf32> to vector<8x32xf32>
    %184 = vector.extract_strided_slice %180 {offsets = [0, 96], sizes = [8, 32], strides = [1, 1]} : vector<8x128xf32> to vector<8x32xf32>
    %185 = arith.mulf %182, %158 : vector<8x32xf32>
    %186 = arith.mulf %181, %183 : vector<8x32xf32>
    %187 = arith.addf %185, %186 : vector<8x32xf32>
    %188 = math.tanh %187 : vector<8x32xf32>
    %189 = arith.mulf %184, %188 : vector<8x32xf32>
    %c5 = arith.constant 5 : index
    %c0_55 = arith.constant 0 : index
    %c0_56 = arith.constant 0 : index
    %190 = vector.load %arg14[%c5, %c0_55, %c0_56] : memref<8x8x32xf32, #tpu.memory_space<vmem>>, vector<1x8x32xf32>
    %191 = vector.shape_cast %190 : vector<1x8x32xf32> to vector<8x32xf32>
    %192 = vector.shape_cast %189 : vector<8x32xf32> to vector<1x8x32xf32>
    tpu.vector_store %arg14[%c5, %c0_55, %c0_56], %192 {strides = array<i32>} : memref<8x8x32xf32, #tpu.memory_space<vmem>>, vector<1x8x32xf32>,
    %193 = vector.extract_strided_slice %14 {offsets = [6, 0, 0], sizes = [1, 8, 128], strides = [1, 1, 1]} : vector<8x8x128xf32> to vector<1x8x128xf32>
    %194 = vector.shape_cast %193 : vector<1x8x128xf32> to vector<8x128xf32>
    %cst_57 = arith.constant dense<0.000000e+00> : vector<8x128xf32>
    %195 = tpu.matmul %189, %7, %cst_57 {dimension_numbers = #tpu.dot_dimension_numbers<[1], [0], [0], [1], [0, 0, 1, 1], [], []>} : vector<8x32xf32>, vector<32x128xf32>, vector<8x128xf32> -> vector<8x128xf32>
    %196 = arith.addf %194, %195 : vector<8x128xf32>
    %cst_58 = arith.constant 2.000000e+00 : f32
    %197 = vector.broadcast %cst_58 : f32 to vector<8x128xf32>
    %198 = arith.mulf %197, %196 : vector<8x128xf32>
    %199 = arith.select %5, %198, %196 : vector<8x128xi1>, vector<8x128xf32>
    %200 = arith.negf %199 : vector<8x128xf32>
    %201 = math.exp %200 : vector<8x128xf32>
    %cst_59 = arith.constant 1.000000e+00 : f32
    %202 = vector.broadcast %cst_59 : f32 to vector<8x128xf32>
    %203 = arith.addf %202, %201 : vector<8x128xf32>
    %204 = arith.divf %202, %203 : vector<8x128xf32>
    %cst_60 = arith.constant 2.000000e+00 : f32
    %205 = vector.broadcast %cst_60 : f32 to vector<8x128xf32>
    %206 = arith.mulf %205, %204 : vector<8x128xf32>
    %cst_61 = arith.constant 1.000000e+00 : f32
    %207 = vector.broadcast %cst_61 : f32 to vector<8x128xf32>
    %208 = arith.subf %206, %207 : vector<8x128xf32>
    %209 = arith.select %5, %208, %204 : vector<8x128xi1>, vector<8x128xf32>
    %210 = vector.extract_strided_slice %209 {offsets = [0, 0], sizes = [8, 32], strides = [1, 1]} : vector<8x128xf32> to vector<8x32xf32>
    %211 = vector.extract_strided_slice %209 {offsets = [0, 32], sizes = [8, 32], strides = [1, 1]} : vector<8x128xf32> to vector<8x32xf32>
    %212 = vector.extract_strided_slice %209 {offsets = [0, 64], sizes = [8, 32], strides = [1, 1]} : vector<8x128xf32> to vector<8x32xf32>
    %213 = vector.extract_strided_slice %209 {offsets = [0, 96], sizes = [8, 32], strides = [1, 1]} : vector<8x128xf32> to vector<8x32xf32>
    %214 = arith.mulf %211, %187 : vector<8x32xf32>
    %215 = arith.mulf %210, %212 : vector<8x32xf32>
    %216 = arith.addf %214, %215 : vector<8x32xf32>
    %217 = math.tanh %216 : vector<8x32xf32>
    %218 = arith.mulf %213, %217 : vector<8x32xf32>
    %c6 = arith.constant 6 : index
    %c0_62 = arith.constant 0 : index
    %c0_63 = arith.constant 0 : index
    %219 = vector.load %arg14[%c6, %c0_62, %c0_63] : memref<8x8x32xf32, #tpu.memory_space<vmem>>, vector<1x8x32xf32>
    %220 = vector.shape_cast %219 : vector<1x8x32xf32> to vector<8x32xf32>
    %221 = vector.shape_cast %218 : vector<8x32xf32> to vector<1x8x32xf32>
    tpu.vector_store %arg14[%c6, %c0_62, %c0_63], %221 {strides = array<i32>} : memref<8x8x32xf32, #tpu.memory_space<vmem>>, vector<1x8x32xf32>,
    %222 = vector.extract_strided_slice %14 {offsets = [7, 0, 0], sizes = [1, 8, 128], strides = [1, 1, 1]} : vector<8x8x128xf32> to vector<1x8x128xf32>
    %223 = vector.shape_cast %222 : vector<1x8x128xf32> to vector<8x128xf32>
    %cst_64 = arith.constant dense<0.000000e+00> : vector<8x128xf32>
    %224 = tpu.matmul %218, %7, %cst_64 {dimension_numbers = #tpu.dot_dimension_numbers<[1], [0], [0], [1], [0, 0, 1, 1], [], []>} : vector<8x32xf32>, vector<32x128xf32>, vector<8x128xf32> -> vector<8x128xf32>
    %225 = arith.addf %223, %224 : vector<8x128xf32>
    %cst_65 = arith.constant 2.000000e+00 : f32
    %226 = vector.broadcast %cst_65 : f32 to vector<8x128xf32>
    %227 = arith.mulf %226, %225 : vector<8x128xf32>
    %228 = arith.select %5, %227, %225 : vector<8x128xi1>, vector<8x128xf32>
    %229 = arith.negf %228 : vector<8x128xf32>
    %230 = math.exp %229 : vector<8x128xf32>
    %cst_66 = arith.constant 1.000000e+00 : f32
    %231 = vector.broadcast %cst_66 : f32 to vector<8x128xf32>
    %232 = arith.addf %231, %230 : vector<8x128xf32>
    %233 = arith.divf %231, %232 : vector<8x128xf32>
    %cst_67 = arith.constant 2.000000e+00 : f32
    %234 = vector.broadcast %cst_67 : f32 to vector<8x128xf32>
    %235 = arith.mulf %234, %233 : vector<8x128xf32>
    %cst_68 = arith.constant 1.000000e+00 : f32
    %236 = vector.broadcast %cst_68 : f32 to vector<8x128xf32>
    %237 = arith.subf %235, %236 : vector<8x128xf32>
    %238 = arith.select %5, %237, %233 : vector<8x128xi1>, vector<8x128xf32>
    %239 = vector.extract_strided_slice %238 {offsets = [0, 0], sizes = [8, 32], strides = [1, 1]} : vector<8x128xf32> to vector<8x32xf32>
    %240 = vector.extract_strided_slice %238 {offsets = [0, 32], sizes = [8, 32], strides = [1, 1]} : vector<8x128xf32> to vector<8x32xf32>
    %241 = vector.extract_strided_slice %238 {offsets = [0, 64], sizes = [8, 32], strides = [1, 1]} : vector<8x128xf32> to vector<8x32xf32>
    %242 = vector.extract_strided_slice %238 {offsets = [0, 96], sizes = [8, 32], strides = [1, 1]} : vector<8x128xf32> to vector<8x32xf32>
    %243 = arith.mulf %240, %216 : vector<8x32xf32>
    %244 = arith.mulf %239, %241 : vector<8x32xf32>
    %245 = arith.addf %243, %244 : vector<8x32xf32>
    %246 = math.tanh %245 : vector<8x32xf32>
    %247 = arith.mulf %242, %246 : vector<8x32xf32>
    %c7 = arith.constant 7 : index
    %c0_69 = arith.constant 0 : index
    %c0_70 = arith.constant 0 : index
    %248 = vector.load %arg14[%c7, %c0_69, %c0_70] : memref<8x8x32xf32, #tpu.memory_space<vmem>>, vector<1x8x32xf32>
    %249 = vector.shape_cast %248 : vector<1x8x32xf32> to vector<8x32xf32>
    %250 = vector.shape_cast %247 : vector<8x32xf32> to vector<1x8x32xf32>
    tpu.vector_store %arg14[%c7, %c0_69, %c0_70], %250 {strides = array<i32>} : memref<8x8x32xf32, #tpu.memory_space<vmem>>, vector<1x8x32xf32>,
    %c0_71 = arith.constant 0 : index
    %c0_72 = arith.constant 0 : index
    %c0_73 = arith.constant 0 : index
    %251 = vector.load %arg12[%c0_71, %c0_72, %c0_73] : memref<2x8x32xf32, #tpu.memory_space<vmem>>, vector<1x8x32xf32>
    %252 = vector.shape_cast %251 : vector<1x8x32xf32> to vector<8x32xf32>
    %253 = vector.shape_cast %247 : vector<8x32xf32> to vector<1x8x32xf32>
    tpu.vector_store %arg12[%c0_71, %c0_72, %c0_73], %253 {strides = array<i32>} : memref<2x8x32xf32, #tpu.memory_space<vmem>>, vector<1x8x32xf32>,
    %c0_74 = arith.constant 0 : index
    %c0_75 = arith.constant 0 : index
    %c0_76 = arith.constant 0 : index
    %254 = vector.load %arg13[%c0_74, %c0_75, %c0_76] : memref<2x8x32xf32, #tpu.memory_space<vmem>>, vector<1x8x32xf32>
    %255 = vector.shape_cast %254 : vector<1x8x32xf32> to vector<8x32xf32>
    %256 = vector.shape_cast %245 : vector<8x32xf32> to vector<1x8x32xf32>
    tpu.vector_store %arg13[%c0_74, %c0_75, %c0_76], %256 {strides = array<i32>} : memref<2x8x32xf32, #tpu.memory_space<vmem>>, vector<1x8x32xf32>,
    %c0_77 = arith.constant 0 : index
    %c0_78 = arith.constant 0 : index
    %257 = vector.load %arg6[%c0_77, %c0_78] : memref<32x128xf32, #tpu.memory_space<vmem>>, vector<32x128xf32>
    %c0_79 = arith.constant 0 : index
    %c0_80 = arith.constant 0 : index
    %258 = vector.load %arg7[%c0_79, %c0_80] : memref<32x128xf32, #tpu.memory_space<vmem>>, vector<32x128xf32>
    %c0_81 = arith.constant 0 : index
    %c0_82 = arith.constant 0 : index
    %259 = vector.load %arg8[%c0_81, %c0_82] : memref<1x128xf32, #tpu.memory_space<vmem>>, vector<1x128xf32>
    %c0_83 = arith.constant 0 : index
    %c0_84 = arith.constant 0 : index
    %c0_85 = arith.constant 0 : index
    %260 = vector.load %arg14[%c0_83, %c0_84, %c0_85] : memref<8x8x32xf32, #tpu.memory_space<vmem>>, vector<8x8x32xf32>
    %261 = vector.shape_cast %260 : vector<8x8x32xf32> to vector<64x32xf32>
    %cst_86 = arith.constant dense<0.000000e+00> : vector<64x128xf32>
    %262 = tpu.matmul %261, %257, %cst_86 {dimension_numbers = #tpu.dot_dimension_numbers<[1], [0], [0], [1], [0, 0, 1, 1], [], []>} : vector<64x32xf32>, vector<32x128xf32>, vector<64x128xf32> -> vector<64x128xf32>
    %263 = vector.broadcast %259 : vector<1x128xf32> to vector<64x128xf32>
    %264 = arith.addf %262, %263 : vector<64x128xf32>
    %265 = vector.shape_cast %264 : vector<64x128xf32> to vector<8x8x128xf32>
    %c1_87 = arith.constant 1 : index
    %c0_88 = arith.constant 0 : index
    %c0_89 = arith.constant 0 : index
    %266 = vector.load %arg1[%c1_87, %c0_88, %c0_89] : memref<2x8x32xf32, #tpu.memory_space<vmem>>, vector<1x8x32xf32>
    %267 = vector.shape_cast %266 : vector<1x8x32xf32> to vector<8x32xf32>
    %c1_90 = arith.constant 1 : index
    %c0_91 = arith.constant 0 : index
    %c0_92 = arith.constant 0 : index
    %268 = vector.load %arg2[%c1_90, %c0_91, %c0_92] : memref<2x8x32xf32, #tpu.memory_space<vmem>>, vector<1x8x32xf32>
    %269 = vector.shape_cast %268 : vector<1x8x32xf32> to vector<8x32xf32>
    %270 = vector.extract_strided_slice %265 {offsets = [0, 0, 0], sizes = [1, 8, 128], strides = [1, 1, 1]} : vector<8x8x128xf32> to vector<1x8x128xf32>
    %271 = vector.shape_cast %270 : vector<1x8x128xf32> to vector<8x128xf32>
    %cst_93 = arith.constant dense<0.000000e+00> : vector<8x128xf32>
    %272 = tpu.matmul %267, %258, %cst_93 {dimension_numbers = #tpu.dot_dimension_numbers<[1], [0], [0], [1], [0, 0, 1, 1], [], []>} : vector<8x32xf32>, vector<32x128xf32>, vector<8x128xf32> -> vector<8x128xf32>
    %273 = arith.addf %271, %272 : vector<8x128xf32>
    %cst_94 = arith.constant 2.000000e+00 : f32
    %274 = vector.broadcast %cst_94 : f32 to vector<8x128xf32>
    %275 = arith.mulf %274, %273 : vector<8x128xf32>
    %276 = arith.select %5, %275, %273 : vector<8x128xi1>, vector<8x128xf32>
    %277 = arith.negf %276 : vector<8x128xf32>
    %278 = math.exp %277 : vector<8x128xf32>
    %cst_95 = arith.constant 1.000000e+00 : f32
    %279 = vector.broadcast %cst_95 : f32 to vector<8x128xf32>
    %280 = arith.addf %279, %278 : vector<8x128xf32>
    %281 = arith.divf %279, %280 : vector<8x128xf32>
    %cst_96 = arith.constant 2.000000e+00 : f32
    %282 = vector.broadcast %cst_96 : f32 to vector<8x128xf32>
    %283 = arith.mulf %282, %281 : vector<8x128xf32>
    %cst_97 = arith.constant 1.000000e+00 : f32
    %284 = vector.broadcast %cst_97 : f32 to vector<8x128xf32>
    %285 = arith.subf %283, %284 : vector<8x128xf32>
    %286 = arith.select %5, %285, %281 : vector<8x128xi1>, vector<8x128xf32>
    %287 = vector.extract_strided_slice %286 {offsets = [0, 0], sizes = [8, 32], strides = [1, 1]} : vector<8x128xf32> to vector<8x32xf32>
    %288 = vector.extract_strided_slice %286 {offsets = [0, 32], sizes = [8, 32], strides = [1, 1]} : vector<8x128xf32> to vector<8x32xf32>
    %289 = vector.extract_strided_slice %286 {offsets = [0, 64], sizes = [8, 32], strides = [1, 1]} : vector<8x128xf32> to vector<8x32xf32>
    %290 = vector.extract_strided_slice %286 {offsets = [0, 96], sizes = [8, 32], strides = [1, 1]} : vector<8x128xf32> to vector<8x32xf32>
    %291 = arith.mulf %288, %269 : vector<8x32xf32>
    %292 = arith.mulf %287, %289 : vector<8x32xf32>
    %293 = arith.addf %291, %292 : vector<8x32xf32>
    %294 = math.tanh %293 : vector<8x32xf32>
    %295 = arith.mulf %290, %294 : vector<8x32xf32>
    %296 = vector.extract_strided_slice %265 {offsets = [1, 0, 0], sizes = [1, 8, 128], strides = [1, 1, 1]} : vector<8x8x128xf32> to vector<1x8x128xf32>
    %297 = vector.shape_cast %296 : vector<1x8x128xf32> to vector<8x128xf32>
    %cst_98 = arith.constant dense<0.000000e+00> : vector<8x128xf32>
    %298 = tpu.matmul %295, %258, %cst_98 {dimension_numbers = #tpu.dot_dimension_numbers<[1], [0], [0], [1], [0, 0, 1, 1], [], []>} : vector<8x32xf32>, vector<32x128xf32>, vector<8x128xf32> -> vector<8x128xf32>
    %299 = arith.addf %297, %298 : vector<8x128xf32>
    %cst_99 = arith.constant 2.000000e+00 : f32
    %300 = vector.broadcast %cst_99 : f32 to vector<8x128xf32>
    %301 = arith.mulf %300, %299 : vector<8x128xf32>
    %302 = arith.select %5, %301, %299 : vector<8x128xi1>, vector<8x128xf32>
    %303 = arith.negf %302 : vector<8x128xf32>
    %304 = math.exp %303 : vector<8x128xf32>
    %cst_100 = arith.constant 1.000000e+00 : f32
    %305 = vector.broadcast %cst_100 : f32 to vector<8x128xf32>
    %306 = arith.addf %305, %304 : vector<8x128xf32>
    %307 = arith.divf %305, %306 : vector<8x128xf32>
    %cst_101 = arith.constant 2.000000e+00 : f32
    %308 = vector.broadcast %cst_101 : f32 to vector<8x128xf32>
    %309 = arith.mulf %308, %307 : vector<8x128xf32>
    %cst_102 = arith.constant 1.000000e+00 : f32
    %310 = vector.broadcast %cst_102 : f32 to vector<8x128xf32>
    %311 = arith.subf %309, %310 : vector<8x128xf32>
    %312 = arith.select %5, %311, %307 : vector<8x128xi1>, vector<8x128xf32>
    %313 = vector.extract_strided_slice %312 {offsets = [0, 0], sizes = [8, 32], strides = [1, 1]} : vector<8x128xf32> to vector<8x32xf32>
    %314 = vector.extract_strided_slice %312 {offsets = [0, 32], sizes = [8, 32], strides = [1, 1]} : vector<8x128xf32> to vector<8x32xf32>
    %315 = vector.extract_strided_slice %312 {offsets = [0, 64], sizes = [8, 32], strides = [1, 1]} : vector<8x128xf32> to vector<8x32xf32>
    %316 = vector.extract_strided_slice %312 {offsets = [0, 96], sizes = [8, 32], strides = [1, 1]} : vector<8x128xf32> to vector<8x32xf32>
    %317 = arith.mulf %314, %293 : vector<8x32xf32>
    %318 = arith.mulf %313, %315 : vector<8x32xf32>
    %319 = arith.addf %317, %318 : vector<8x32xf32>
    %320 = math.tanh %319 : vector<8x32xf32>
    %321 = arith.mulf %316, %320 : vector<8x32xf32>
    %322 = vector.extract_strided_slice %265 {offsets = [2, 0, 0], sizes = [1, 8, 128], strides = [1, 1, 1]} : vector<8x8x128xf32> to vector<1x8x128xf32>
    %323 = vector.shape_cast %322 : vector<1x8x128xf32> to vector<8x128xf32>
    %cst_103 = arith.constant dense<0.000000e+00> : vector<8x128xf32>
    %324 = tpu.matmul %321, %258, %cst_103 {dimension_numbers = #tpu.dot_dimension_numbers<[1], [0], [0], [1], [0, 0, 1, 1], [], []>} : vector<8x32xf32>, vector<32x128xf32>, vector<8x128xf32> -> vector<8x128xf32>
    %325 = arith.addf %323, %324 : vector<8x128xf32>
    %cst_104 = arith.constant 2.000000e+00 : f32
    %326 = vector.broadcast %cst_104 : f32 to vector<8x128xf32>
    %327 = arith.mulf %326, %325 : vector<8x128xf32>
    %328 = arith.select %5, %327, %325 : vector<8x128xi1>, vector<8x128xf32>
    %329 = arith.negf %328 : vector<8x128xf32>
    %330 = math.exp %329 : vector<8x128xf32>
    %cst_105 = arith.constant 1.000000e+00 : f32
    %331 = vector.broadcast %cst_105 : f32 to vector<8x128xf32>
    %332 = arith.addf %331, %330 : vector<8x128xf32>
    %333 = arith.divf %331, %332 : vector<8x128xf32>
    %cst_106 = arith.constant 2.000000e+00 : f32
    %334 = vector.broadcast %cst_106 : f32 to vector<8x128xf32>
    %335 = arith.mulf %334, %333 : vector<8x128xf32>
    %cst_107 = arith.constant 1.000000e+00 : f32
    %336 = vector.broadcast %cst_107 : f32 to vector<8x128xf32>
    %337 = arith.subf %335, %336 : vector<8x128xf32>
    %338 = arith.select %5, %337, %333 : vector<8x128xi1>, vector<8x128xf32>
    %339 = vector.extract_strided_slice %338 {offsets = [0, 0], sizes = [8, 32], strides = [1, 1]} : vector<8x128xf32> to vector<8x32xf32>
    %340 = vector.extract_strided_slice %338 {offsets = [0, 32], sizes = [8, 32], strides = [1, 1]} : vector<8x128xf32> to vector<8x32xf32>
    %341 = vector.extract_strided_slice %338 {offsets = [0, 64], sizes = [8, 32], strides = [1, 1]} : vector<8x128xf32> to vector<8x32xf32>
    %342 = vector.extract_strided_slice %338 {offsets = [0, 96], sizes = [8, 32], strides = [1, 1]} : vector<8x128xf32> to vector<8x32xf32>
    %343 = arith.mulf %340, %319 : vector<8x32xf32>
    %344 = arith.mulf %339, %341 : vector<8x32xf32>
    %345 = arith.addf %343, %344 : vector<8x32xf32>
    %346 = math.tanh %345 : vector<8x32xf32>
    %347 = arith.mulf %342, %346 : vector<8x32xf32>
    %348 = vector.extract_strided_slice %265 {offsets = [3, 0, 0], sizes = [1, 8, 128], strides = [1, 1, 1]} : vector<8x8x128xf32> to vector<1x8x128xf32>
    %349 = vector.shape_cast %348 : vector<1x8x128xf32> to vector<8x128xf32>
    %cst_108 = arith.constant dense<0.000000e+00> : vector<8x128xf32>
    %350 = tpu.matmul %347, %258, %cst_108 {dimension_numbers = #tpu.dot_dimension_numbers<[1], [0], [0], [1], [0, 0, 1, 1], [], []>} : vector<8x32xf32>, vector<32x128xf32>, vector<8x128xf32> -> vector<8x128xf32>
    %351 = arith.addf %349, %350 : vector<8x128xf32>
    %cst_109 = arith.constant 2.000000e+00 : f32
    %352 = vector.broadcast %cst_109 : f32 to vector<8x128xf32>
    %353 = arith.mulf %352, %351 : vector<8x128xf32>
    %354 = arith.select %5, %353, %351 : vector<8x128xi1>, vector<8x128xf32>
    %355 = arith.negf %354 : vector<8x128xf32>
    %356 = math.exp %355 : vector<8x128xf32>
    %cst_110 = arith.constant 1.000000e+00 : f32
    %357 = vector.broadcast %cst_110 : f32 to vector<8x128xf32>
    %358 = arith.addf %357, %356 : vector<8x128xf32>
    %359 = arith.divf %357, %358 : vector<8x128xf32>
    %cst_111 = arith.constant 2.000000e+00 : f32
    %360 = vector.broadcast %cst_111 : f32 to vector<8x128xf32>
    %361 = arith.mulf %360, %359 : vector<8x128xf32>
    %cst_112 = arith.constant 1.000000e+00 : f32
    %362 = vector.broadcast %cst_112 : f32 to vector<8x128xf32>
    %363 = arith.subf %361, %362 : vector<8x128xf32>
    %364 = arith.select %5, %363, %359 : vector<8x128xi1>, vector<8x128xf32>
    %365 = vector.extract_strided_slice %364 {offsets = [0, 0], sizes = [8, 32], strides = [1, 1]} : vector<8x128xf32> to vector<8x32xf32>
    %366 = vector.extract_strided_slice %364 {offsets = [0, 32], sizes = [8, 32], strides = [1, 1]} : vector<8x128xf32> to vector<8x32xf32>
    %367 = vector.extract_strided_slice %364 {offsets = [0, 64], sizes = [8, 32], strides = [1, 1]} : vector<8x128xf32> to vector<8x32xf32>
    %368 = vector.extract_strided_slice %364 {offsets = [0, 96], sizes = [8, 32], strides = [1, 1]} : vector<8x128xf32> to vector<8x32xf32>
    %369 = arith.mulf %366, %345 : vector<8x32xf32>
    %370 = arith.mulf %365, %367 : vector<8x32xf32>
    %371 = arith.addf %369, %370 : vector<8x32xf32>
    %372 = math.tanh %371 : vector<8x32xf32>
    %373 = arith.mulf %368, %372 : vector<8x32xf32>
    %374 = vector.extract_strided_slice %265 {offsets = [4, 0, 0], sizes = [1, 8, 128], strides = [1, 1, 1]} : vector<8x8x128xf32> to vector<1x8x128xf32>
    %375 = vector.shape_cast %374 : vector<1x8x128xf32> to vector<8x128xf32>
    %cst_113 = arith.constant dense<0.000000e+00> : vector<8x128xf32>
    %376 = tpu.matmul %373, %258, %cst_113 {dimension_numbers = #tpu.dot_dimension_numbers<[1], [0], [0], [1], [0, 0, 1, 1], [], []>} : vector<8x32xf32>, vector<32x128xf32>, vector<8x128xf32> -> vector<8x128xf32>
    %377 = arith.addf %375, %376 : vector<8x128xf32>
    %cst_114 = arith.constant 2.000000e+00 : f32
    %378 = vector.broadcast %cst_114 : f32 to vector<8x128xf32>
    %379 = arith.mulf %378, %377 : vector<8x128xf32>
    %380 = arith.select %5, %379, %377 : vector<8x128xi1>, vector<8x128xf32>
    %381 = arith.negf %380 : vector<8x128xf32>
    %382 = math.exp %381 : vector<8x128xf32>
    %cst_115 = arith.constant 1.000000e+00 : f32
    %383 = vector.broadcast %cst_115 : f32 to vector<8x128xf32>
    %384 = arith.addf %383, %382 : vector<8x128xf32>
    %385 = arith.divf %383, %384 : vector<8x128xf32>
    %cst_116 = arith.constant 2.000000e+00 : f32
    %386 = vector.broadcast %cst_116 : f32 to vector<8x128xf32>
    %387 = arith.mulf %386, %385 : vector<8x128xf32>
    %cst_117 = arith.constant 1.000000e+00 : f32
    %388 = vector.broadcast %cst_117 : f32 to vector<8x128xf32>
    %389 = arith.subf %387, %388 : vector<8x128xf32>
    %390 = arith.select %5, %389, %385 : vector<8x128xi1>, vector<8x128xf32>
    %391 = vector.extract_strided_slice %390 {offsets = [0, 0], sizes = [8, 32], strides = [1, 1]} : vector<8x128xf32> to vector<8x32xf32>
    %392 = vector.extract_strided_slice %390 {offsets = [0, 32], sizes = [8, 32], strides = [1, 1]} : vector<8x128xf32> to vector<8x32xf32>
    %393 = vector.extract_strided_slice %390 {offsets = [0, 64], sizes = [8, 32], strides = [1, 1]} : vector<8x128xf32> to vector<8x32xf32>
    %394 = vector.extract_strided_slice %390 {offsets = [0, 96], sizes = [8, 32], strides = [1, 1]} : vector<8x128xf32> to vector<8x32xf32>
    %395 = arith.mulf %392, %371 : vector<8x32xf32>
    %396 = arith.mulf %391, %393 : vector<8x32xf32>
    %397 = arith.addf %395, %396 : vector<8x32xf32>
    %398 = math.tanh %397 : vector<8x32xf32>
    %399 = arith.mulf %394, %398 : vector<8x32xf32>
    %400 = vector.extract_strided_slice %265 {offsets = [5, 0, 0], sizes = [1, 8, 128], strides = [1, 1, 1]} : vector<8x8x128xf32> to vector<1x8x128xf32>
    %401 = vector.shape_cast %400 : vector<1x8x128xf32> to vector<8x128xf32>
    %cst_118 = arith.constant dense<0.000000e+00> : vector<8x128xf32>
    %402 = tpu.matmul %399, %258, %cst_118 {dimension_numbers = #tpu.dot_dimension_numbers<[1], [0], [0], [1], [0, 0, 1, 1], [], []>} : vector<8x32xf32>, vector<32x128xf32>, vector<8x128xf32> -> vector<8x128xf32>
    %403 = arith.addf %401, %402 : vector<8x128xf32>
    %cst_119 = arith.constant 2.000000e+00 : f32
    %404 = vector.broadcast %cst_119 : f32 to vector<8x128xf32>
    %405 = arith.mulf %404, %403 : vector<8x128xf32>
    %406 = arith.select %5, %405, %403 : vector<8x128xi1>, vector<8x128xf32>
    %407 = arith.negf %406 : vector<8x128xf32>
    %408 = math.exp %407 : vector<8x128xf32>
    %cst_120 = arith.constant 1.000000e+00 : f32
    %409 = vector.broadcast %cst_120 : f32 to vector<8x128xf32>
    %410 = arith.addf %409, %408 : vector<8x128xf32>
    %411 = arith.divf %409, %410 : vector<8x128xf32>
    %cst_121 = arith.constant 2.000000e+00 : f32
    %412 = vector.broadcast %cst_121 : f32 to vector<8x128xf32>
    %413 = arith.mulf %412, %411 : vector<8x128xf32>
    %cst_122 = arith.constant 1.000000e+00 : f32
    %414 = vector.broadcast %cst_122 : f32 to vector<8x128xf32>
    %415 = arith.subf %413, %414 : vector<8x128xf32>
    %416 = arith.select %5, %415, %411 : vector<8x128xi1>, vector<8x128xf32>
    %417 = vector.extract_strided_slice %416 {offsets = [0, 0], sizes = [8, 32], strides = [1, 1]} : vector<8x128xf32> to vector<8x32xf32>
    %418 = vector.extract_strided_slice %416 {offsets = [0, 32], sizes = [8, 32], strides = [1, 1]} : vector<8x128xf32> to vector<8x32xf32>
    %419 = vector.extract_strided_slice %416 {offsets = [0, 64], sizes = [8, 32], strides = [1, 1]} : vector<8x128xf32> to vector<8x32xf32>
    %420 = vector.extract_strided_slice %416 {offsets = [0, 96], sizes = [8, 32], strides = [1, 1]} : vector<8x128xf32> to vector<8x32xf32>
    %421 = arith.mulf %418, %397 : vector<8x32xf32>
    %422 = arith.mulf %417, %419 : vector<8x32xf32>
    %423 = arith.addf %421, %422 : vector<8x32xf32>
    %424 = math.tanh %423 : vector<8x32xf32>
    %425 = arith.mulf %420, %424 : vector<8x32xf32>
    %426 = vector.extract_strided_slice %265 {offsets = [6, 0, 0], sizes = [1, 8, 128], strides = [1, 1, 1]} : vector<8x8x128xf32> to vector<1x8x128xf32>
    %427 = vector.shape_cast %426 : vector<1x8x128xf32> to vector<8x128xf32>
    %cst_123 = arith.constant dense<0.000000e+00> : vector<8x128xf32>
    %428 = tpu.matmul %425, %258, %cst_123 {dimension_numbers = #tpu.dot_dimension_numbers<[1], [0], [0], [1], [0, 0, 1, 1], [], []>} : vector<8x32xf32>, vector<32x128xf32>, vector<8x128xf32> -> vector<8x128xf32>
    %429 = arith.addf %427, %428 : vector<8x128xf32>
    %cst_124 = arith.constant 2.000000e+00 : f32
    %430 = vector.broadcast %cst_124 : f32 to vector<8x128xf32>
    %431 = arith.mulf %430, %429 : vector<8x128xf32>
    %432 = arith.select %5, %431, %429 : vector<8x128xi1>, vector<8x128xf32>
    %433 = arith.negf %432 : vector<8x128xf32>
    %434 = math.exp %433 : vector<8x128xf32>
    %cst_125 = arith.constant 1.000000e+00 : f32
    %435 = vector.broadcast %cst_125 : f32 to vector<8x128xf32>
    %436 = arith.addf %435, %434 : vector<8x128xf32>
    %437 = arith.divf %435, %436 : vector<8x128xf32>
    %cst_126 = arith.constant 2.000000e+00 : f32
    %438 = vector.broadcast %cst_126 : f32 to vector<8x128xf32>
    %439 = arith.mulf %438, %437 : vector<8x128xf32>
    %cst_127 = arith.constant 1.000000e+00 : f32
    %440 = vector.broadcast %cst_127 : f32 to vector<8x128xf32>
    %441 = arith.subf %439, %440 : vector<8x128xf32>
    %442 = arith.select %5, %441, %437 : vector<8x128xi1>, vector<8x128xf32>
    %443 = vector.extract_strided_slice %442 {offsets = [0, 0], sizes = [8, 32], strides = [1, 1]} : vector<8x128xf32> to vector<8x32xf32>
    %444 = vector.extract_strided_slice %442 {offsets = [0, 32], sizes = [8, 32], strides = [1, 1]} : vector<8x128xf32> to vector<8x32xf32>
    %445 = vector.extract_strided_slice %442 {offsets = [0, 64], sizes = [8, 32], strides = [1, 1]} : vector<8x128xf32> to vector<8x32xf32>
    %446 = vector.extract_strided_slice %442 {offsets = [0, 96], sizes = [8, 32], strides = [1, 1]} : vector<8x128xf32> to vector<8x32xf32>
    %447 = arith.mulf %444, %423 : vector<8x32xf32>
    %448 = arith.mulf %443, %445 : vector<8x32xf32>
    %449 = arith.addf %447, %448 : vector<8x32xf32>
    %450 = math.tanh %449 : vector<8x32xf32>
    %451 = arith.mulf %446, %450 : vector<8x32xf32>
    %452 = vector.extract_strided_slice %265 {offsets = [7, 0, 0], sizes = [1, 8, 128], strides = [1, 1, 1]} : vector<8x8x128xf32> to vector<1x8x128xf32>
    %453 = vector.shape_cast %452 : vector<1x8x128xf32> to vector<8x128xf32>
    %cst_128 = arith.constant dense<0.000000e+00> : vector<8x128xf32>
    %454 = tpu.matmul %451, %258, %cst_128 {dimension_numbers = #tpu.dot_dimension_numbers<[1], [0], [0], [1], [0, 0, 1, 1], [], []>} : vector<8x32xf32>, vector<32x128xf32>, vector<8x128xf32> -> vector<8x128xf32>
    %455 = arith.addf %453, %454 : vector<8x128xf32>
    %cst_129 = arith.constant 2.000000e+00 : f32
    %456 = vector.broadcast %cst_129 : f32 to vector<8x128xf32>
    %457 = arith.mulf %456, %455 : vector<8x128xf32>
    %458 = arith.select %5, %457, %455 : vector<8x128xi1>, vector<8x128xf32>
    %459 = arith.negf %458 : vector<8x128xf32>
    %460 = math.exp %459 : vector<8x128xf32>
    %cst_130 = arith.constant 1.000000e+00 : f32
    %461 = vector.broadcast %cst_130 : f32 to vector<8x128xf32>
    %462 = arith.addf %461, %460 : vector<8x128xf32>
    %463 = arith.divf %461, %462 : vector<8x128xf32>
    %cst_131 = arith.constant 2.000000e+00 : f32
    %464 = vector.broadcast %cst_131 : f32 to vector<8x128xf32>
    %465 = arith.mulf %464, %463 : vector<8x128xf32>
    %cst_132 = arith.constant 1.000000e+00 : f32
    %466 = vector.broadcast %cst_132 : f32 to vector<8x128xf32>
    %467 = arith.subf %465, %466 : vector<8x128xf32>
    %468 = arith.select %5, %467, %463 : vector<8x128xi1>, vector<8x128xf32>
    %469 = vector.extract_strided_slice %468 {offsets = [0, 0], sizes = [8, 32], strides = [1, 1]} : vector<8x128xf32> to vector<8x32xf32>
    %470 = vector.extract_strided_slice %468 {offsets = [0, 32], sizes = [8, 32], strides = [1, 1]} : vector<8x128xf32> to vector<8x32xf32>
    %471 = vector.extract_strided_slice %468 {offsets = [0, 64], sizes = [8, 32], strides = [1, 1]} : vector<8x128xf32> to vector<8x32xf32>
    %472 = vector.extract_strided_slice %468 {offsets = [0, 96], sizes = [8, 32], strides = [1, 1]} : vector<8x128xf32> to vector<8x32xf32>
    %473 = arith.mulf %470, %449 : vector<8x32xf32>
    %474 = arith.mulf %469, %471 : vector<8x32xf32>
    %475 = arith.addf %473, %474 : vector<8x32xf32>
    %476 = math.tanh %475 : vector<8x32xf32>
    %477 = arith.mulf %472, %476 : vector<8x32xf32>
    %c1_133 = arith.constant 1 : index
    %c0_134 = arith.constant 0 : index
    %c0_135 = arith.constant 0 : index
    %478 = vector.load %arg12[%c1_133, %c0_134, %c0_135] : memref<2x8x32xf32, #tpu.memory_space<vmem>>, vector<1x8x32xf32>
    %479 = vector.shape_cast %478 : vector<1x8x32xf32> to vector<8x32xf32>
    %480 = vector.shape_cast %477 : vector<8x32xf32> to vector<1x8x32xf32>
    tpu.vector_store %arg12[%c1_133, %c0_134, %c0_135], %480 {strides = array<i32>} : memref<2x8x32xf32, #tpu.memory_space<vmem>>, vector<1x8x32xf32>,
    %c1_136 = arith.constant 1 : index
    %c0_137 = arith.constant 0 : index
    %c0_138 = arith.constant 0 : index
    %481 = vector.load %arg13[%c1_136, %c0_137, %c0_138] : memref<2x8x32xf32, #tpu.memory_space<vmem>>, vector<1x8x32xf32>
    %482 = vector.shape_cast %481 : vector<1x8x32xf32> to vector<8x32xf32>
    %483 = vector.shape_cast %475 : vector<8x32xf32> to vector<1x8x32xf32>
    tpu.vector_store %arg13[%c1_136, %c0_137, %c0_138], %483 {strides = array<i32>} : memref<2x8x32xf32, #tpu.memory_space<vmem>>, vector<1x8x32xf32>,
    %c0_139 = arith.constant 0 : index
    %c0_140 = arith.constant 0 : index
    %484 = vector.load %arg9[%c0_139, %c0_140] : memref<32x128xf32, #tpu.memory_space<vmem>>, vector<32x128xf32>
    %cst_141 = arith.constant dense<0.000000e+00> : vector<8x128xf32>
    %485 = tpu.matmul %477, %484, %cst_141 {dimension_numbers = #tpu.dot_dimension_numbers<[1], [0], [0], [1], [0, 0, 1, 1], [], []>} : vector<8x32xf32>, vector<32x128xf32>, vector<8x128xf32> -> vector<8x128xf32>
    %c0_142 = arith.constant 0 : index
    %c0_143 = arith.constant 0 : index
    %486 = vector.load %arg10[%c0_142, %c0_143] : memref<1x128xf32, #tpu.memory_space<vmem>>, vector<1x128xf32>
    %487 = vector.broadcast %486 : vector<1x128xf32> to vector<8x128xf32>
    %488 = arith.addf %485, %487 : vector<8x128xf32>
    %c0_144 = arith.constant 0 : index
    %c0_145 = arith.constant 0 : index
    %489 = vector.load %arg11[%c0_144, %c0_145] : memref<8x128xf32, #tpu.memory_space<vmem>>, vector<8x128xf32>
    tpu.vector_store %arg11[%c0_144, %c0_145], %488 {strides = array<i32>} : memref<8x128xf32, #tpu.memory_space<vmem>>, vector<8x128xf32>,
    return
  }
}

</mosaic_0001>

<llo_original>
// kernel: text_generator_forward.1
$region0: #{text_generator_forward.1}
  #allocation0 [shape = 'u32[]', space=smem, size = 0x4, offset = 0x4, fixed_abs, tag = 'smem constant byte address 0x4 - core index']
  #allocation1 [shape = 'u32[144,128]{1,0:T(1,128)}', space=vmem, size = 0x12000, scoped, tag = 'internal scratch']
  #allocation2 [shape = 'f32[8,8,32]{2,1,0:T(8,128)}', space=vmem, size = 0x8000, scoped, tag = 'scratch operand']
  %s0 = inlined_call_operand.vmem [shape: f32[8,8,128], index: 0, kind: input, shape index: {}]
  %s1 = inlined_call_operand.vmem [shape: f32[2,8,32], index: 1, kind: input, shape index: {}]
  %s2 = inlined_call_operand.vmem [shape: f32[2,8,32], index: 2, kind: input, shape index: {}]
  %s3 = inlined_call_operand.vmem [shape: f32[128,128], index: 3, kind: input, shape index: {}]
  %s4 = inlined_call_operand.vmem [shape: f32[32,128], index: 4, kind: input, shape index: {}]
  %s5 = inlined_call_operand.vmem [shape: f32[1,128], index: 5, kind: input, shape index: {}]
  %s6 = inlined_call_operand.hbm [shape: f32[32,128], index: 6, kind: input, shape index: {}]
  %s7 = inlined_call_operand.hbm [shape: f32[32,128], index: 7, kind: input, shape index: {}]
  %s8 = inlined_call_operand.vmem [shape: f32[1,128], index: 8, kind: input, shape index: {}]
  %s9 = inlined_call_operand.hbm [shape: f32[32,128], index: 9, kind: input, shape index: {}]
  %s10 = inlined_call_operand.vmem [shape: f32[1,128], index: 10, kind: input, shape index: {}]
  %s11 = inlined_call_operand.vmem [shape: f32[8,128], index: 11, kind: output, shape index: {0}]
  %s12 = inlined_call_operand.vmem [shape: f32[2,8,32], index: 12, kind: output, shape index: {1}]
  %s13 = inlined_call_operand.vmem [shape: f32[2,8,32], index: 13, kind: output, shape index: {2}]
  %14 = xla_tuple %s11, %s12, %s13
  %s15 = sld [smem:[#allocation0]]
  $region82: #{text_generator_forward.1} parent=0
    _
  %s17 = ssub.s32 1, %s15
  %s18 = scalar_select 0, %s17, %s15
  $region1: #{text_generator_forward.1} parent=0
    #allocation3 [shape = 'u8[16384]{0}', space=vmem, size = 0x4000, scoped, tag = 'input window, operand 6, single buffered']
    #allocation4 [shape = 's32[1]{0}', space=sflag, size = 0x4, scoped, tag = 'scoped memory for text_generator_forward.1']
    #allocation5 [shape = 'u8[16384]{0}', space=vmem, size = 0x4000, scoped, tag = 'input window, operand 7, single buffered']
    #allocation6 [shape = 's32[1]{0}', space=sflag, size = 0x4, scoped, tag = 'scoped memory for text_generator_forward.1']
    #allocation7 [shape = 'u8[16384]{0}', space=vmem, size = 0x4000, scoped, tag = 'input window, operand 9, single buffered']
    %19 = vsyncpa [#allocation4], 0
    %20 = vsyncpa [#allocation6], 0
    // Predicated region
    $region2: #{text_generator_forward.1} parent=1 // pred_check
      _
    $region3: #{text_generator_forward.1} parent=1 // pred_check_branch
      %22 = sbr.rel (0) target = $region5
    $region4: #{text_generator_forward.1} parent=1 // pred_region
      _
    $region5: #{text_generator_forward.1} parent=1 // pred_fallthru
      _
    // Predicated region
    $region6: #{text_generator_forward.1} parent=1 // pred_check
      _
    $region7: #{text_generator_forward.1} parent=1 // pred_check_branch
      %24 = sbr.rel (0) target = $region9
    $region8: #{text_generator_forward.1} parent=1 // pred_region
      _
    $region9: #{text_generator_forward.1} parent=1 // pred_fallthru
      _
    // Predicated region
    $region10: #{text_generator_forward.1} parent=1 // pred_check
      _
    $region11: #{text_generator_forward.1} parent=1 // pred_check_branch
      %26 = sbr.rel (0) target = $region13
    $region12: #{text_generator_forward.1} parent=1 // pred_region
      _
    $region13: #{text_generator_forward.1} parent=1 // pred_fallthru
      _
    // Predicated region
    $region14: #{text_generator_forward.1} parent=1 // pred_check
      _
    $region15: #{text_generator_forward.1} parent=1 // pred_check_branch
      %28 = sbr.rel (0) target = $region17
    $region16: #{text_generator_forward.1} parent=1 // pred_region
      _
    $region17: #{text_generator_forward.1} parent=1 // pred_fallthru
      _
    // Predicated region
    $region18: #{text_generator_forward.1} parent=1 // pred_check
      _
    $region19: #{text_generator_forward.1} parent=1 // pred_check_branch
      %30 = sbr.rel (0) target = $region21
    $region20: #{text_generator_forward.1} parent=1 // pred_region
      _
    $region21: #{text_generator_forward.1} parent=1 // pred_fallthru
      _
    // Predicated region
    $region22: #{text_generator_forward.1} parent=1 // pred_check
      _
    $region23: #{text_generator_forward.1} parent=1 // pred_check_branch
      %32 = sbr.rel (0) target = $region25
    $region24: #{text_generator_forward.1} parent=1 // pred_region
      _
    $region25: #{text_generator_forward.1} parent=1 // pred_fallthru
      _
    // Predicated region
    $region26: #{text_generator_forward.1} parent=1 // pred_check
      _
    $region27: #{text_generator_forward.1} parent=1 // pred_check_branch
      %34 = sbr.rel (0) target = $region29
    $region28: #{text_generator_forward.1} parent=1 // pred_region
      %s36 = ssub.s32 512, 512
      %37 = vsyncadd [#allocation4], %s36
      %s38 = sshll.u32 [#allocation3], 4
      %s39 = int_to_ptr.vmem [resolvable:$true] %s38
      %44 = dma.hbm_to_vmem [thread:$0]  %s6, 512, %s39, [#allocation4], 128, 128, 8
    $region29: #{text_generator_forward.1} parent=1 // pred_fallthru
      _
    // Predicated region
    $region30: #{text_generator_forward.1} parent=1 // pred_check
      _
    $region31: #{text_generator_forward.1} parent=1 // pred_check_branch
      %46 = sbr.rel (0) target = $region33
    $region32: #{text_generator_forward.1} parent=1 // pred_region
      %s48 = ssub.s32 512, 512
      %49 = vsyncadd [#allocation6], %s48
      %s50 = sshll.u32 [#allocation5], 4
      %s51 = int_to_ptr.vmem [resolvable:$true] %s50
      %56 = dma.hbm_to_vmem [thread:$0]  %s7, 512, %s51, [#allocation6], 128, 128, 8
    $region33: #{text_generator_forward.1} parent=1 // pred_fallthru
      _
    // Predicated region
    $region34: #{text_generator_forward.1} parent=1 // pred_check
      _
    $region35: #{text_generator_forward.1} parent=1 // pred_check_branch
      %58 = sbr.rel (0) target = $region37
    $region36: #{text_generator_forward.1} parent=1 // pred_region
      _
    $region37: #{text_generator_forward.1} parent=1 // pred_fallthru
      _
    // Predicated region
    $region38: #{text_generator_forward.1} parent=1 // pred_check
      _
    $region39: #{text_generator_forward.1} parent=1 // pred_check_branch
      %60 = sbr.rel (0) target = $region41
    $region40: #{text_generator_forward.1} parent=1 // pred_region
      %s62 = ssub.s32 512, 512
      %63 = vsyncadd [#allocation6], %s62
      %s64 = sshll.u32 [#allocation7], 4
      %s65 = int_to_ptr.vmem [resolvable:$true] %s64
      %70 = dma.hbm_to_vmem [thread:$0]  %s9, 512, %s65, [#allocation6], 128, 128, 8
    $region41: #{text_generator_forward.1} parent=1 // pred_fallthru
      _
    // Predicated region
    $region42: #{text_generator_forward.1} parent=1 // pred_check
      _
    $region43: #{text_generator_forward.1} parent=1 // pred_check_branch
      %72 = sbr.rel (0) target = $region45
    $region44: #{text_generator_forward.1} parent=1 // pred_region
      _
    $region45: #{text_generator_forward.1} parent=1 // pred_fallthru
      _
    // Predicated region
    $region46: #{text_generator_forward.1} parent=1 // pred_check
      _
    $region47: #{text_generator_forward.1} parent=1 // pred_check_branch
      %74 = sbr.rel (0) target = $region49
    $region48: #{text_generator_forward.1} parent=1 // pred_region
      %75 = dma.done [#allocation4], 512
    $region49: #{text_generator_forward.1} parent=1 // pred_fallthru
      _
    // Predicated region
    $region50: #{text_generator_forward.1} parent=1 // pred_check
      _
    $region51: #{text_generator_forward.1} parent=1 // pred_check_branch
      %77 = sbr.rel (0) target = $region53
    $region52: #{text_generator_forward.1} parent=1 // pred_region
      %78 = dma.done [#allocation6], 512
    $region53: #{text_generator_forward.1} parent=1 // pred_fallthru
      _
    // Predicated region
    $region54: #{text_generator_forward.1} parent=1 // pred_check
      _
    $region55: #{text_generator_forward.1} parent=1 // pred_check_branch
      %80 = sbr.rel (0) target = $region57
    $region56: #{text_generator_forward.1} parent=1 // pred_region
      %81 = dma.done [#allocation6], 512
    $region57: #{text_generator_forward.1} parent=1 // pred_fallthru
      _
    %v82 = vlaneseq
    %v83 = vand.u32 %v82, 127
    %vm84 = vcmp.ge.s32.totalorder %v83, 64
    %vm85 = vcmp.lt.s32.totalorder %v83, 96
    %vm86 = vmand %vm84, %vm85
    %v87 = vld [vmem:[%s3] sm:$0xff]
    %v88 = vld [vmem:[%s3 + $0x8] sm:$0xff]
    %v89 = vld [vmem:[%s3 + $0x10] sm:$0xff]
    %v90 = vld [vmem:[%s3 + $0x18] sm:$0xff]
    %v91 = vld [vmem:[%s3 + $0x20] sm:$0xff]
    %v92 = vld [vmem:[%s3 + $0x28] sm:$0xff]
    %v93 = vld [vmem:[%s3 + $0x30] sm:$0xff]
    %v94 = vld [vmem:[%s3 + $0x38] sm:$0xff]
    %v95 = vld [vmem:[%s3 + $0x40] sm:$0xff]
    %v96 = vld [vmem:[%s3 + $0x48] sm:$0xff]
    %v97 = vld [vmem:[%s3 + $0x50] sm:$0xff]
    %v98 = vld [vmem:[%s3 + $0x58] sm:$0xff]
    %v99 = vld [vmem:[%s3 + $0x60] sm:$0xff]
    %v100 = vld [vmem:[%s3 + $0x68] sm:$0xff]
    %v101 = vld [vmem:[%s3 + $0x70] sm:$0xff]
    %v102 = vld [vmem:[%s3 + $0x78] sm:$0xff]
    %v103 = vld [vmem:[%s4] sm:$0xff]
    %v104 = vld [vmem:[%s4 + $0x8] sm:$0xff]
    %v105 = vld [vmem:[%s4 + $0x10] sm:$0xff]
    %v106 = vld [vmem:[%s4 + $0x18] sm:$0xff]
    %v107 = vld [vmem:[%s5] sm:$0x1]
    %v108 = vld [vmem:[%s0] sm:$0xff]
    %v109 = vld [vmem:[%s0 + $0x8] sm:$0xff]
    %v110 = vld [vmem:[%s0 + $0x10] sm:$0xff]
    %v111 = vld [vmem:[%s0 + $0x18] sm:$0xff]
    %v112 = vld [vmem:[%s0 + $0x20] sm:$0xff]
    %v113 = vld [vmem:[%s0 + $0x28] sm:$0xff]
    %v114 = vld [vmem:[%s0 + $0x30] sm:$0xff]
    %v115 = vld [vmem:[%s0 + $0x38] sm:$0xff]
    %v117 = vlaneseq
    %v118 = vshrl.u32 %v117, 7
    %v119 = vsub.s32 0, %v118
    %v120 = vrot.slane %v107, %v119
    %122 = vmatprep.subr.mxu0 0.0
    %123 = vmatpush1.msra.mxu0 %v102
    %124 = vmatprep.subr.mxu0 0.0
    %125 = vmatpush1.msra.mxu0 %v101
    %126 = vmatprep.subr.mxu0 0.0
    %127 = vmatpush1.msra.mxu0 %v100
    %128 = vmatprep.subr.mxu0 0.0
    %129 = vmatpush1.msra.mxu0 %v99
    %130 = vmatprep.subr.mxu0 0.0
    %131 = vmatpush1.msra.mxu0 %v98
    %132 = vmatprep.subr.mxu0 0.0
    %133 = vmatpush1.msra.mxu0 %v97
    %134 = vmatprep.subr.mxu0 0.0
    %135 = vmatpush1.msra.mxu0 %v96
    %136 = vmatprep.subr.mxu0 0.0
    %137 = vmatpush1.msra.mxu0 %v95
    %138 = vmatprep.subr.mxu0 0.0
    %139 = vmatpush1.msra.mxu0 %v94
    %140 = vmatprep.subr.mxu0 0.0
    %141 = vmatpush1.msra.mxu0 %v93
    %142 = vmatprep.subr.mxu0 0.0
    %143 = vmatpush1.msra.mxu0 %v92
    %144 = vmatprep.subr.mxu0 0.0
    %145 = vmatpush1.msra.mxu0 %v91
    %146 = vmatprep.subr.mxu0 0.0
    %147 = vmatpush1.msra.mxu0 %v90
    %148 = vmatprep.subr.mxu0 0.0
    %149 = vmatpush1.msra.mxu0 %v89
    %150 = vmatprep.subr.mxu0 0.0
    %151 = vmatpush1.msra.mxu0 %v88
    %152 = vmatprep.subr.mxu0 0.0
    %153 = vmatpush1.msra.mxu0 %v87
    %154 = vmatprep.subr.mxu0 0.0
    %155 = vmatpush2.msra.mxu0 0.0
    %156 = vmatprep.subr.mxu0 0.0
    %157 = vmatpush2.msra.mxu0 0.0
    %158 = vmatprep.subr.mxu0 0.0
    %159 = vmatpush2.msra.mxu0 0.0
    %160 = vmatprep.subr.mxu0 0.0
    %161 = vmatpush2.msra.mxu0 0.0
    %162 = vmatprep.subr.mxu0 0.0
    %163 = vmatpush2.msra.mxu0 0.0
    %164 = vmatprep.subr.mxu0 0.0
    %165 = vmatpush2.msra.mxu0 0.0
    %166 = vmatprep.subr.mxu0 0.0
    %167 = vmatpush2.msra.mxu0 0.0
    %168 = vmatprep.subr.mxu0 0.0
    %169 = vmatpush2.msra.mxu0 0.0
    %170 = vmatprep.subr.mxu0 0.0
    %171 = vmatpush2.msra.mxu0 0.0
    %172 = vmatprep.subr.mxu0 0.0
    %173 = vmatpush2.msra.mxu0 0.0
    %174 = vmatprep.subr.mxu0 0.0
    %175 = vmatpush2.msra.mxu0 0.0
    %176 = vmatprep.subr.mxu0 0.0
    %177 = vmatpush2.msra.mxu0 0.0
    %178 = vmatprep.subr.mxu0 0.0
    %179 = vmatpush2.msra.mxu0 0.0
    %180 = vmatprep.subr.mxu0 0.0
    %181 = vmatpush2.msra.mxu0 0.0
    %182 = vmatprep.subr.mxu0 0.0
    %183 = vmatpush2.msra.mxu0 0.0
    %184 = vmatprep.subr.mxu0 0.0
    %185 = vmatpush2.msra.mxu0 0.0
    %186 = vmatprep.mubr.f32.mxu0 0.0
    %187 = vmatmul.mubr.f32.gmra.mxu0 %v108
    %v188 = vpop.f32.mrf.mxu0
    %v189 = vadd.f32 %v120, %v188
    %v190 = vpop.f32.mrf.mxu0
    %191 = vmatprep.mubr.f32.mxu0 0.0
    %192 = vmatmul.mubr.f32.gmra.mxu0 %v109
    %v193 = vpop.f32.mrf.mxu0
    %v194 = vadd.f32 %v120, %v193
    %v195 = vpop.f32.mrf.mxu0
    %196 = vmatprep.mubr.f32.mxu0 0.0
    %197 = vmatmul.mubr.f32.gmra.mxu0 %v110
    %v198 = vpop.f32.mrf.mxu0
    %v199 = vadd.f32 %v120, %v198
    %v200 = vpop.f32.mrf.mxu0
    %201 = vmatprep.mubr.f32.mxu0 0.0
    %202 = vmatmul.mubr.f32.gmra.mxu0 %v111
    %v203 = vpop.f32.mrf.mxu0
    %v204 = vadd.f32 %v120, %v203
    %v205 = vpop.f32.mrf.mxu0
    %206 = vmatprep.mubr.f32.mxu0 0.0
    %207 = vmatmul.mubr.f32.gmra.mxu0 %v112
    %v208 = vpop.f32.mrf.mxu0
    %v209 = vadd.f32 %v120, %v208
    %v210 = vpop.f32.mrf.mxu0
    %211 = vmatprep.mubr.f32.mxu0 0.0
    %212 = vmatmul.mubr.f32.gmra.mxu0 %v113
    %v213 = vpop.f32.mrf.mxu0
    %v214 = vadd.f32 %v120, %v213
    %v215 = vpop.f32.mrf.mxu0
    %216 = vmatprep.mubr.f32.mxu0 0.0
    %217 = vmatmul.mubr.f32.gmra.mxu0 %v114
    %v218 = vpop.f32.mrf.mxu0
    %v219 = vadd.f32 %v120, %v218
    %v220 = vpop.f32.mrf.mxu0
    %221 = vmatprep.mubr.f32.mxu0 0.0
    %222 = vmatmul.mubr.f32.gmra.mxu0 %v115
    %v223 = vpop.f32.mrf.mxu0
    %v224 = vadd.f32 %v120, %v223
    %v225 = vpop.f32.mrf.mxu0
    %226 = vdwg.mxu0
    %v227 = vld [vmem:[%s1] sm:$0xff]
    %v228 = vld [vmem:[%s2] sm:$0xff]
    %vm229 = vcmask 261120
    %v231 = vsel %vm229, %v227, 0
    %233 = vmatprep.subr.mxu0 0.0
    %234 = vmatpush1.msra.mxu0 0.0
    %235 = vmatprep.subr.mxu0 0.0
    %236 = vmatpush1.msra.mxu0 0.0
    %237 = vmatprep.subr.mxu0 0.0
    %238 = vmatpush1.msra.mxu0 0.0
    %239 = vmatprep.subr.mxu0 0.0
    %240 = vmatpush1.msra.mxu0 0.0
    %241 = vmatprep.subr.mxu0 0.0
    %242 = vmatpush1.msra.mxu0 0.0
    %243 = vmatprep.subr.mxu0 0.0
    %244 = vmatpush1.msra.mxu0 0.0
    %245 = vmatprep.subr.mxu0 0.0
    %246 = vmatpush1.msra.mxu0 0.0
    %247 = vmatprep.subr.mxu0 0.0
    %248 = vmatpush1.msra.mxu0 0.0
    %249 = vmatprep.subr.mxu0 0.0
    %250 = vmatpush1.msra.mxu0 0.0
    %251 = vmatprep.subr.mxu0 0.0
    %252 = vmatpush1.msra.mxu0 0.0
    %253 = vmatprep.subr.mxu0 0.0
    %254 = vmatpush1.msra.mxu0 0.0
    %255 = vmatprep.subr.mxu0 0.0
    %256 = vmatpush1.msra.mxu0 0.0
    %257 = vmatprep.subr.mxu0 0.0
    %258 = vmatpush1.msra.mxu0 %v106
    %259 = vmatprep.subr.mxu0 0.0
    %260 = vmatpush1.msra.mxu0 %v105
    %261 = vmatprep.subr.mxu0 0.0
    %262 = vmatpush1.msra.mxu0 %v104
    %263 = vmatprep.subr.mxu0 0.0
    %264 = vmatpush1.msra.mxu0 %v103
    %265 = vmatprep.subr.mxu0 0.0
    %266 = vmatpush2.msra.mxu0 0.0
    %267 = vmatprep.subr.mxu0 0.0
    %268 = vmatpush2.msra.mxu0 0.0
    %269 = vmatprep.subr.mxu0 0.0
    %270 = vmatpush2.msra.mxu0 0.0
    %271 = vmatprep.subr.mxu0 0.0
    %272 = vmatpush2.msra.mxu0 0.0
    %273 = vmatprep.subr.mxu0 0.0
    %274 = vmatpush2.msra.mxu0 0.0
    %275 = vmatprep.subr.mxu0 0.0
    %276 = vmatpush2.msra.mxu0 0.0
    %277 = vmatprep.subr.mxu0 0.0
    %278 = vmatpush2.msra.mxu0 0.0
    %279 = vmatprep.subr.mxu0 0.0
    %280 = vmatpush2.msra.mxu0 0.0
    %281 = vmatprep.subr.mxu0 0.0
    %282 = vmatpush2.msra.mxu0 0.0
    %283 = vmatprep.subr.mxu0 0.0
    %284 = vmatpush2.msra.mxu0 0.0
    %285 = vmatprep.subr.mxu0 0.0
    %286 = vmatpush2.msra.mxu0 0.0
    %287 = vmatprep.subr.mxu0 0.0
    %288 = vmatpush2.msra.mxu0 0.0
    %289 = vmatprep.subr.mxu0 0.0
    %290 = vmatpush2.msra.mxu0 0.0
    %291 = vmatprep.subr.mxu0 0.0
    %292 = vmatpush2.msra.mxu0 0.0
    %293 = vmatprep.subr.mxu0 0.0
    %294 = vmatpush2.msra.mxu0 0.0
    %295 = vmatprep.subr.mxu0 0.0
    %296 = vmatpush2.msra.mxu0 0.0
    %297 = vmatprep.mubr.f32.mxu0 0.0
    %298 = vmatmul.mubr.f32.gmra.mxu0 %v231
    %v299 = vpop.f32.mrf.mxu0
    %v300 = vadd.f32 0.0, %v299
    %v301 = vpop.f32.mrf.mxu0
    %302 = vdwg.mxu0
    %v303 = vadd.f32 %v189, %v300
    %v304 = vmul.f32 %v303, 2.0
    %v305 = vsel %vm86, %v304, %v303
    %v306 = vxor.u32 %v305, 2147483648
    %v307 = vmul.f32 %v306, 1.442695
    %v308 = vpow.pop %v307
    %v309 = vadd.f32 %v308, 1.0
    %v310 = vrcp.pop %v309
    %v311 = vmul.f32 1.0, %v310
    %v312 = vmul.f32 %v311, 2.0
    %v313 = vsub.f32 %v312, 1.0
    %v314 = vsel %vm86, %v313, %v311
    %316 = vrot.lane.b32.xlu0 %v228, 32
    %v317 = vpop.permute.xlu0 %316
    %v319 = vmul.f32 %v314, %v317
    %321 = vrot.lane.b32.xlu0 %v314, 64
    %v322 = vpop.permute.xlu0 %321
    %v324 = vmul.f32 %v314, %v322
    %326 = vrot.lane.b32.xlu0 %v324, 32
    %v327 = vpop.permute.xlu0 %326
    %v329 = vadd.f32 %v319, %v327
    %v330 = vtanh.pop %v329
    %332 = vrot.lane.b32.xlu0 %v330, 64
    %v333 = vpop.permute.xlu0 %332
    %v335 = vmul.f32 %v314, %v333
    %337 = vrot.lane.b32.xlu0 %v335, 32
    %v338 = vpop.permute.xlu0 %337
    %340 = vst.msk [vmem:[#allocation2] sm:$0xff] %vm229, %v338
    %v341 = vsel %vm229, %v338, 0
    %343 = vmatprep.subr.mxu0 0.0
    %344 = vmatpush1.msra.mxu0 0.0
    %345 = vmatprep.subr.mxu0 0.0
    %346 = vmatpush1.msra.mxu0 0.0
    %347 = vmatprep.subr.mxu0 0.0
    %348 = vmatpush1.msra.mxu0 0.0
    %349 = vmatprep.subr.mxu0 0.0
    %350 = vmatpush1.msra.mxu0 0.0
    %351 = vmatprep.subr.mxu0 0.0
    %352 = vmatpush1.msra.mxu0 0.0
    %353 = vmatprep.subr.mxu0 0.0
    %354 = vmatpush1.msra.mxu0 0.0
    %355 = vmatprep.subr.mxu0 0.0
    %356 = vmatpush1.msra.mxu0 0.0
    %357 = vmatprep.subr.mxu0 0.0
    %358 = vmatpush1.msra.mxu0 0.0
    %359 = vmatprep.subr.mxu0 0.0
    %360 = vmatpush1.msra.mxu0 0.0
    %361 = vmatprep.subr.mxu0 0.0
    %362 = vmatpush1.msra.mxu0 0.0
    %363 = vmatprep.subr.mxu0 0.0
    %364 = vmatpush1.msra.mxu0 0.0
    %365 = vmatprep.subr.mxu0 0.0
    %366 = vmatpush1.msra.mxu0 0.0
    %367 = vmatprep.subr.mxu0 0.0
    %368 = vmatpush1.msra.mxu0 %v106
    %369 = vmatprep.subr.mxu0 0.0
    %370 = vmatpush1.msra.mxu0 %v105
    %371 = vmatprep.subr.mxu0 0.0
    %372 = vmatpush1.msra.mxu0 %v104
    %373 = vmatprep.subr.mxu0 0.0
    %374 = vmatpush1.msra.mxu0 %v103
    %375 = vmatprep.subr.mxu0 0.0
    %376 = vmatpush2.msra.mxu0 0.0
    %377 = vmatprep.subr.mxu0 0.0
    %378 = vmatpush2.msra.mxu0 0.0
    %379 = vmatprep.subr.mxu0 0.0
    %380 = vmatpush2.msra.mxu0 0.0
    %381 = vmatprep.subr.mxu0 0.0
    %382 = vmatpush2.msra.mxu0 0.0
    %383 = vmatprep.subr.mxu0 0.0
    %384 = vmatpush2.msra.mxu0 0.0
    %385 = vmatprep.subr.mxu0 0.0
    %386 = vmatpush2.msra.mxu0 0.0
    %387 = vmatprep.subr.mxu0 0.0
    %388 = vmatpush2.msra.mxu0 0.0
    %389 = vmatprep.subr.mxu0 0.0
    %390 = vmatpush2.msra.mxu0 0.0
    %391 = vmatprep.subr.mxu0 0.0
    %392 = vmatpush2.msra.mxu0 0.0
    %393 = vmatprep.subr.mxu0 0.0
    %394 = vmatpush2.msra.mxu0 0.0
    %395 = vmatprep.subr.mxu0 0.0
    %396 = vmatpush2.msra.mxu0 0.0
    %397 = vmatprep.subr.mxu0 0.0
    %398 = vmatpush2.msra.mxu0 0.0
    %399 = vmatprep.subr.mxu0 0.0
    %400 = vmatpush2.msra.mxu0 0.0
    %401 = vmatprep.subr.mxu0 0.0
    %402 = vmatpush2.msra.mxu0 0.0
    %403 = vmatprep.subr.mxu0 0.0
    %404 = vmatpush2.msra.mxu0 0.0
    %405 = vmatprep.subr.mxu0 0.0
    %406 = vmatpush2.msra.mxu0 0.0
    %407 = vmatprep.mubr.f32.mxu0 0.0
    %408 = vmatmul.mubr.f32.gmra.mxu0 %v341
    %v409 = vpop.f32.mrf.mxu0
    %v410 = vadd.f32 0.0, %v409
    %v411 = vpop.f32.mrf.mxu0
    %412 = vdwg.mxu0
    %v413 = vadd.f32 %v194, %v410
    %v414 = vmul.f32 %v413, 2.0
    %v415 = vsel %vm86, %v414, %v413
    %v416 = vxor.u32 %v415, 2147483648
    %v417 = vmul.f32 %v416, 1.442695
    %v418 = vpow.pop %v417
    %v419 = vadd.f32 %v418, 1.0
    %v420 = vrcp.pop %v419
    %v421 = vmul.f32 1.0, %v420
    %v422 = vmul.f32 %v421, 2.0
    %v423 = vsub.f32 %v422, 1.0
    %v424 = vsel %vm86, %v423, %v421
    %v425 = vmul.f32 %v424, %v329
    %427 = vrot.lane.b32.xlu0 %v424, 64
    %v428 = vpop.permute.xlu0 %427
    %v430 = vmul.f32 %v424, %v428
    %432 = vrot.lane.b32.xlu0 %v430, 32
    %v433 = vpop.permute.xlu0 %432
    %v435 = vadd.f32 %v425, %v433
    %v436 = vtanh.pop %v435
    %438 = vrot.lane.b32.xlu0 %v436, 64
    %v439 = vpop.permute.xlu0 %438
    %v441 = vmul.f32 %v424, %v439
    %443 = vrot.lane.b32.xlu0 %v441, 32
    %v444 = vpop.permute.xlu0 %443
    %s446 = scalar_lea.vmem [#allocation2], 8
    %447 = vst.msk [vmem:[%s446] sm:$0xff] %vm229, %v444
    %v448 = vsel %vm229, %v444, 0
    %450 = vmatprep.subr.mxu0 0.0
    %451 = vmatpush1.msra.mxu0 0.0
    %452 = vmatprep.subr.mxu0 0.0
    %453 = vmatpush1.msra.mxu0 0.0
    %454 = vmatprep.subr.mxu0 0.0
    %455 = vmatpush1.msra.mxu0 0.0
    %456 = vmatprep.subr.mxu0 0.0
    %457 = vmatpush1.msra.mxu0 0.0
    %458 = vmatprep.subr.mxu0 0.0
    %459 = vmatpush1.msra.mxu0 0.0
    %460 = vmatprep.subr.mxu0 0.0
    %461 = vmatpush1.msra.mxu0 0.0
    %462 = vmatprep.subr.mxu0 0.0
    %463 = vmatpush1.msra.mxu0 0.0
    %464 = vmatprep.subr.mxu0 0.0
    %465 = vmatpush1.msra.mxu0 0.0
    %466 = vmatprep.subr.mxu0 0.0
    %467 = vmatpush1.msra.mxu0 0.0
    %468 = vmatprep.subr.mxu0 0.0
    %469 = vmatpush1.msra.mxu0 0.0
    %470 = vmatprep.subr.mxu0 0.0
    %471 = vmatpush1.msra.mxu0 0.0
    %472 = vmatprep.subr.mxu0 0.0
    %473 = vmatpush1.msra.mxu0 0.0
    %474 = vmatprep.subr.mxu0 0.0
    %475 = vmatpush1.msra.mxu0 %v106
    %476 = vmatprep.subr.mxu0 0.0
    %477 = vmatpush1.msra.mxu0 %v105
    %478 = vmatprep.subr.mxu0 0.0
    %479 = vmatpush1.msra.mxu0 %v104
    %480 = vmatprep.subr.mxu0 0.0
    %481 = vmatpush1.msra.mxu0 %v103
    %482 = vmatprep.subr.mxu0 0.0
    %483 = vmatpush2.msra.mxu0 0.0
    %484 = vmatprep.subr.mxu0 0.0
    %485 = vmatpush2.msra.mxu0 0.0
    %486 = vmatprep.subr.mxu0 0.0
    %487 = vmatpush2.msra.mxu0 0.0
    %488 = vmatprep.subr.mxu0 0.0
    %489 = vmatpush2.msra.mxu0 0.0
    %490 = vmatprep.subr.mxu0 0.0
    %491 = vmatpush2.msra.mxu0 0.0
    %492 = vmatprep.subr.mxu0 0.0
    %493 = vmatpush2.msra.mxu0 0.0
    %494 = vmatprep.subr.mxu0 0.0
    %495 = vmatpush2.msra.mxu0 0.0
    %496 = vmatprep.subr.mxu0 0.0
    %497 = vmatpush2.msra.mxu0 0.0
    %498 = vmatprep.subr.mxu0 0.0
    %499 = vmatpush2.msra.mxu0 0.0
    %500 = vmatprep.subr.mxu0 0.0
    %501 = vmatpush2.msra.mxu0 0.0
    %502 = vmatprep.subr.mxu0 0.0
    %503 = vmatpush2.msra.mxu0 0.0
    %504 = vmatprep.subr.mxu0 0.0
    %505 = vmatpush2.msra.mxu0 0.0
    %506 = vmatprep.subr.mxu0 0.0
    %507 = vmatpush2.msra.mxu0 0.0
    %508 = vmatprep.subr.mxu0 0.0
    %509 = vmatpush2.msra.mxu0 0.0
    %510 = vmatprep.subr.mxu0 0.0
    %511 = vmatpush2.msra.mxu0 0.0
    %512 = vmatprep.subr.mxu0 0.0
    %513 = vmatpush2.msra.mxu0 0.0
    %514 = vmatprep.mubr.f32.mxu0 0.0
    %515 = vmatmul.mubr.f32.gmra.mxu0 %v448
    %v516 = vpop.f32.mrf.mxu0
    %v517 = vadd.f32 0.0, %v516
    %v518 = vpop.f32.mrf.mxu0
    %519 = vdwg.mxu0
    %v520 = vadd.f32 %v199, %v517
    %v521 = vmul.f32 %v520, 2.0
    %v522 = vsel %vm86, %v521, %v520
    %v523 = vxor.u32 %v522, 2147483648
    %v524 = vmul.f32 %v523, 1.442695
    %v525 = vpow.pop %v524
    %v526 = vadd.f32 %v525, 1.0
    %v527 = vrcp.pop %v526
    %v528 = vmul.f32 1.0, %v527
    %v529 = vmul.f32 %v528, 2.0
    %v530 = vsub.f32 %v529, 1.0
    %v531 = vsel %vm86, %v530, %v528
    %v532 = vmul.f32 %v531, %v435
    %534 = vrot.lane.b32.xlu0 %v531, 64
    %v535 = vpop.permute.xlu0 %534
    %v537 = vmul.f32 %v531, %v535
    %539 = vrot.lane.b32.xlu0 %v537, 32
    %v540 = vpop.permute.xlu0 %539
    %v542 = vadd.f32 %v532, %v540
    %v543 = vtanh.pop %v542
    %545 = vrot.lane.b32.xlu0 %v543, 64
    %v546 = vpop.permute.xlu0 %545
    %v548 = vmul.f32 %v531, %v546
    %550 = vrot.lane.b32.xlu0 %v548, 32
    %v551 = vpop.permute.xlu0 %550
    %s553 = scalar_lea.vmem [#allocation2], 16
    %554 = vst.msk [vmem:[%s553] sm:$0xff] %vm229, %v551
    %v555 = vsel %vm229, %v551, 0
    %557 = vmatprep.subr.mxu0 0.0
    %558 = vmatpush1.msra.mxu0 0.0
    %559 = vmatprep.subr.mxu0 0.0
    %560 = vmatpush1.msra.mxu0 0.0
    %561 = vmatprep.subr.mxu0 0.0
    %562 = vmatpush1.msra.mxu0 0.0
    %563 = vmatprep.subr.mxu0 0.0
    %564 = vmatpush1.msra.mxu0 0.0
    %565 = vmatprep.subr.mxu0 0.0
    %566 = vmatpush1.msra.mxu0 0.0
    %567 = vmatprep.subr.mxu0 0.0
    %568 = vmatpush1.msra.mxu0 0.0
    %569 = vmatprep.subr.mxu0 0.0
    %570 = vmatpush1.msra.mxu0 0.0
    %571 = vmatprep.subr.mxu0 0.0
    %572 = vmatpush1.msra.mxu0 0.0
    %573 = vmatprep.subr.mxu0 0.0
    %574 = vmatpush1.msra.mxu0 0.0
    %575 = vmatprep.subr.mxu0 0.0
    %576 = vmatpush1.msra.mxu0 0.0
    %577 = vmatprep.subr.mxu0 0.0
    %578 = vmatpush1.msra.mxu0 0.0
    %579 = vmatprep.subr.mxu0 0.0
    %580 = vmatpush1.msra.mxu0 0.0
    %581 = vmatprep.subr.mxu0 0.0
    %582 = vmatpush1.msra.mxu0 %v106
    %583 = vmatprep.subr.mxu0 0.0
    %584 = vmatpush1.msra.mxu0 %v105
    %585 = vmatprep.subr.mxu0 0.0
    %586 = vmatpush1.msra.mxu0 %v104
    %587 = vmatprep.subr.mxu0 0.0
    %588 = vmatpush1.msra.mxu0 %v103
    %589 = vmatprep.subr.mxu0 0.0
    %590 = vmatpush2.msra.mxu0 0.0
    %591 = vmatprep.subr.mxu0 0.0
    %592 = vmatpush2.msra.mxu0 0.0
    %593 = vmatprep.subr.mxu0 0.0
    %594 = vmatpush2.msra.mxu0 0.0
    %595 = vmatprep.subr.mxu0 0.0
    %596 = vmatpush2.msra.mxu0 0.0
    %597 = vmatprep.subr.mxu0 0.0
    %598 = vmatpush2.msra.mxu0 0.0
    %599 = vmatprep.subr.mxu0 0.0
    %600 = vmatpush2.msra.mxu0 0.0
    %601 = vmatprep.subr.mxu0 0.0
    %602 = vmatpush2.msra.mxu0 0.0
    %603 = vmatprep.subr.mxu0 0.0
    %604 = vmatpush2.msra.mxu0 0.0
    %605 = vmatprep.subr.mxu0 0.0
    %606 = vmatpush2.msra.mxu0 0.0
    %607 = vmatprep.subr.mxu0 0.0
    %608 = vmatpush2.msra.mxu0 0.0
    %609 = vmatprep.subr.mxu0 0.0
    %610 = vmatpush2.msra.mxu0 0.0
    %611 = vmatprep.subr.mxu0 0.0
    %612 = vmatpush2.msra.mxu0 0.0
    %613 = vmatprep.subr.mxu0 0.0
    %614 = vmatpush2.msra.mxu0 0.0
    %615 = vmatprep.subr.mxu0 0.0
    %616 = vmatpush2.msra.mxu0 0.0
    %617 = vmatprep.subr.mxu0 0.0
    %618 = vmatpush2.msra.mxu0 0.0
    %619 = vmatprep.subr.mxu0 0.0
    %620 = vmatpush2.msra.mxu0 0.0
    %621 = vmatprep.mubr.f32.mxu0 0.0
    %622 = vmatmul.mubr.f32.gmra.mxu0 %v555
    %v623 = vpop.f32.mrf.mxu0
    %v624 = vadd.f32 0.0, %v623
    %v625 = vpop.f32.mrf.mxu0
    %626 = vdwg.mxu0
    %v627 = vadd.f32 %v204, %v624
    %v628 = vmul.f32 %v627, 2.0
    %v629 = vsel %vm86, %v628, %v627
    %v630 = vxor.u32 %v629, 2147483648
    %v631 = vmul.f32 %v630, 1.442695
    %v632 = vpow.pop %v631
    %v633 = vadd.f32 %v632, 1.0
    %v634 = vrcp.pop %v633
    %v635 = vmul.f32 1.0, %v634
    %v636 = vmul.f32 %v635, 2.0
    %v637 = vsub.f32 %v636, 1.0
    %v638 = vsel %vm86, %v637, %v635
    %v639 = vmul.f32 %v638, %v542
    %641 = vrot.lane.b32.xlu0 %v638, 64
    %v642 = vpop.permute.xlu0 %641
    %v644 = vmul.f32 %v638, %v642
    %646 = vrot.lane.b32.xlu0 %v644, 32
    %v647 = vpop.permute.xlu0 %646
    %v649 = vadd.f32 %v639, %v647
    %v650 = vtanh.pop %v649
    %652 = vrot.lane.b32.xlu0 %v650, 64
    %v653 = vpop.permute.xlu0 %652
    %v655 = vmul.f32 %v638, %v653
    %657 = vrot.lane.b32.xlu0 %v655, 32
    %v658 = vpop.permute.xlu0 %657
    %s660 = scalar_lea.vmem [#allocation2], 24
    %661 = vst.msk [vmem:[%s660] sm:$0xff] %vm229, %v658
    %v662 = vsel %vm229, %v658, 0
    %664 = vmatprep.subr.mxu0 0.0
    %665 = vmatpush1.msra.mxu0 0.0
    %666 = vmatprep.subr.mxu0 0.0
    %667 = vmatpush1.msra.mxu0 0.0
    %668 = vmatprep.subr.mxu0 0.0
    %669 = vmatpush1.msra.mxu0 0.0
    %670 = vmatprep.subr.mxu0 0.0
    %671 = vmatpush1.msra.mxu0 0.0
    %672 = vmatprep.subr.mxu0 0.0
    %673 = vmatpush1.msra.mxu0 0.0
    %674 = vmatprep.subr.mxu0 0.0
    %675 = vmatpush1.msra.mxu0 0.0
    %676 = vmatprep.subr.mxu0 0.0
    %677 = vmatpush1.msra.mxu0 0.0
    %678 = vmatprep.subr.mxu0 0.0
    %679 = vmatpush1.msra.mxu0 0.0
    %680 = vmatprep.subr.mxu0 0.0
    %681 = vmatpush1.msra.mxu0 0.0
    %682 = vmatprep.subr.mxu0 0.0
    %683 = vmatpush1.msra.mxu0 0.0
    %684 = vmatprep.subr.mxu0 0.0
    %685 = vmatpush1.msra.mxu0 0.0
    %686 = vmatprep.subr.mxu0 0.0
    %687 = vmatpush1.msra.mxu0 0.0
    %688 = vmatprep.subr.mxu0 0.0
    %689 = vmatpush1.msra.mxu0 %v106
    %690 = vmatprep.subr.mxu0 0.0
    %691 = vmatpush1.msra.mxu0 %v105
    %692 = vmatprep.subr.mxu0 0.0
    %693 = vmatpush1.msra.mxu0 %v104
    %694 = vmatprep.subr.mxu0 0.0
    %695 = vmatpush1.msra.mxu0 %v103
    %696 = vmatprep.subr.mxu0 0.0
    %697 = vmatpush2.msra.mxu0 0.0
    %698 = vmatprep.subr.mxu0 0.0
    %699 = vmatpush2.msra.mxu0 0.0
    %700 = vmatprep.subr.mxu0 0.0
    %701 = vmatpush2.msra.mxu0 0.0
    %702 = vmatprep.subr.mxu0 0.0
    %703 = vmatpush2.msra.mxu0 0.0
    %704 = vmatprep.subr.mxu0 0.0
    %705 = vmatpush2.msra.mxu0 0.0
    %706 = vmatprep.subr.mxu0 0.0
    %707 = vmatpush2.msra.mxu0 0.0
    %708 = vmatprep.subr.mxu0 0.0
    %709 = vmatpush2.msra.mxu0 0.0
    %710 = vmatprep.subr.mxu0 0.0
    %711 = vmatpush2.msra.mxu0 0.0
    %712 = vmatprep.subr.mxu0 0.0
    %713 = vmatpush2.msra.mxu0 0.0
    %714 = vmatprep.subr.mxu0 0.0
    %715 = vmatpush2.msra.mxu0 0.0
    %716 = vmatprep.subr.mxu0 0.0
    %717 = vmatpush2.msra.mxu0 0.0
    %718 = vmatprep.subr.mxu0 0.0
    %719 = vmatpush2.msra.mxu0 0.0
    %720 = vmatprep.subr.mxu0 0.0
    %721 = vmatpush2.msra.mxu0 0.0
    %722 = vmatprep.subr.mxu0 0.0
    %723 = vmatpush2.msra.mxu0 0.0
    %724 = vmatprep.subr.mxu0 0.0
    %725 = vmatpush2.msra.mxu0 0.0
    %726 = vmatprep.subr.mxu0 0.0
    %727 = vmatpush2.msra.mxu0 0.0
    %728 = vmatprep.mubr.f32.mxu0 0.0
    %729 = vmatmul.mubr.f32.gmra.mxu0 %v662
    %v730 = vpop.f32.mrf.mxu0
    %v731 = vadd.f32 0.0, %v730
    %v732 = vpop.f32.mrf.mxu0
    %733 = vdwg.mxu0
    %v734 = vadd.f32 %v209, %v731
    %v735 = vmul.f32 %v734, 2.0
    %v736 = vsel %vm86, %v735, %v734
    %v737 = vxor.u32 %v736, 2147483648
    %v738 = vmul.f32 %v737, 1.442695
    %v739 = vpow.pop %v738
    %v740 = vadd.f32 %v739, 1.0
    %v741 = vrcp.pop %v740
    %v742 = vmul.f32 1.0, %v741
    %v743 = vmul.f32 %v742, 2.0
    %v744 = vsub.f32 %v743, 1.0
    %v745 = vsel %vm86, %v744, %v742
    %v746 = vmul.f32 %v745, %v649
    %748 = vrot.lane.b32.xlu0 %v745, 64
    %v749 = vpop.permute.xlu0 %748
    %v751 = vmul.f32 %v745, %v749
    %753 = vrot.lane.b32.xlu0 %v751, 32
    %v754 = vpop.permute.xlu0 %753
    %v756 = vadd.f32 %v746, %v754
    %v757 = vtanh.pop %v756
    %759 = vrot.lane.b32.xlu0 %v757, 64
    %v760 = vpop.permute.xlu0 %759
    %v762 = vmul.f32 %v745, %v760
    %764 = vrot.lane.b32.xlu0 %v762, 32
    %v765 = vpop.permute.xlu0 %764
    %s767 = scalar_lea.vmem [#allocation2], 32
    %768 = vst.msk [vmem:[%s767] sm:$0xff] %vm229, %v765
    %v769 = vsel %vm229, %v765, 0
    %771 = vmatprep.subr.mxu0 0.0
    %772 = vmatpush1.msra.mxu0 0.0
    %773 = vmatprep.subr.mxu0 0.0
    %774 = vmatpush1.msra.mxu0 0.0
    %775 = vmatprep.subr.mxu0 0.0
    %776 = vmatpush1.msra.mxu0 0.0
    %777 = vmatprep.subr.mxu0 0.0
    %778 = vmatpush1.msra.mxu0 0.0
    %779 = vmatprep.subr.mxu0 0.0
    %780 = vmatpush1.msra.mxu0 0.0
    %781 = vmatprep.subr.mxu0 0.0
    %782 = vmatpush1.msra.mxu0 0.0
    %783 = vmatprep.subr.mxu0 0.0
    %784 = vmatpush1.msra.mxu0 0.0
    %785 = vmatprep.subr.mxu0 0.0
    %786 = vmatpush1.msra.mxu0 0.0
    %787 = vmatprep.subr.mxu0 0.0
    %788 = vmatpush1.msra.mxu0 0.0
    %789 = vmatprep.subr.mxu0 0.0
    %790 = vmatpush1.msra.mxu0 0.0
    %791 = vmatprep.subr.mxu0 0.0
    %792 = vmatpush1.msra.mxu0 0.0
    %793 = vmatprep.subr.mxu0 0.0
    %794 = vmatpush1.msra.mxu0 0.0
    %795 = vmatprep.subr.mxu0 0.0
    %796 = vmatpush1.msra.mxu0 %v106
    %797 = vmatprep.subr.mxu0 0.0
    %798 = vmatpush1.msra.mxu0 %v105
    %799 = vmatprep.subr.mxu0 0.0
    %800 = vmatpush1.msra.mxu0 %v104
    %801 = vmatprep.subr.mxu0 0.0
    %802 = vmatpush1.msra.mxu0 %v103
    %803 = vmatprep.subr.mxu0 0.0
    %804 = vmatpush2.msra.mxu0 0.0
    %805 = vmatprep.subr.mxu0 0.0
    %806 = vmatpush2.msra.mxu0 0.0
    %807 = vmatprep.subr.mxu0 0.0
    %808 = vmatpush2.msra.mxu0 0.0
    %809 = vmatprep.subr.mxu0 0.0
    %810 = vmatpush2.msra.mxu0 0.0
    %811 = vmatprep.subr.mxu0 0.0
    %812 = vmatpush2.msra.mxu0 0.0
    %813 = vmatprep.subr.mxu0 0.0
    %814 = vmatpush2.msra.mxu0 0.0
    %815 = vmatprep.subr.mxu0 0.0
    %816 = vmatpush2.msra.mxu0 0.0
    %817 = vmatprep.subr.mxu0 0.0
    %818 = vmatpush2.msra.mxu0 0.0
    %819 = vmatprep.subr.mxu0 0.0
    %820 = vmatpush2.msra.mxu0 0.0
    %821 = vmatprep.subr.mxu0 0.0
    %822 = vmatpush2.msra.mxu0 0.0
    %823 = vmatprep.subr.mxu0 0.0
    %824 = vmatpush2.msra.mxu0 0.0
    %825 = vmatprep.subr.mxu0 0.0
    %826 = vmatpush2.msra.mxu0 0.0
    %827 = vmatprep.subr.mxu0 0.0
    %828 = vmatpush2.msra.mxu0 0.0
    %829 = vmatprep.subr.mxu0 0.0
    %830 = vmatpush2.msra.mxu0 0.0
    %831 = vmatprep.subr.mxu0 0.0
    %832 = vmatpush2.msra.mxu0 0.0
    %833 = vmatprep.subr.mxu0 0.0
    %834 = vmatpush2.msra.mxu0 0.0
    %835 = vmatprep.mubr.f32.mxu0 0.0
    %836 = vmatmul.mubr.f32.gmra.mxu0 %v769
    %v837 = vpop.f32.mrf.mxu0
    %v838 = vadd.f32 0.0, %v837
    %v839 = vpop.f32.mrf.mxu0
    %840 = vdwg.mxu0
    %v841 = vadd.f32 %v214, %v838
    %v842 = vmul.f32 %v841, 2.0
    %v843 = vsel %vm86, %v842, %v841
    %v844 = vxor.u32 %v843, 2147483648
    %v845 = vmul.f32 %v844, 1.442695
    %v846 = vpow.pop %v845
    %v847 = vadd.f32 %v846, 1.0
    %v848 = vrcp.pop %v847
    %v849 = vmul.f32 1.0, %v848
    %v850 = vmul.f32 %v849, 2.0
    %v851 = vsub.f32 %v850, 1.0
    %v852 = vsel %vm86, %v851, %v849
    %v853 = vmul.f32 %v852, %v756
    %855 = vrot.lane.b32.xlu0 %v852, 64
    %v856 = vpop.permute.xlu0 %855
    %v858 = vmul.f32 %v852, %v856
    %860 = vrot.lane.b32.xlu0 %v858, 32
    %v861 = vpop.permute.xlu0 %860
    %v863 = vadd.f32 %v853, %v861
    %v864 = vtanh.pop %v863
    %866 = vrot.lane.b32.xlu0 %v864, 64
    %v867 = vpop.permute.xlu0 %866
    %v869 = vmul.f32 %v852, %v867
    %871 = vrot.lane.b32.xlu0 %v869, 32
    %v872 = vpop.permute.xlu0 %871
    %s874 = scalar_lea.vmem [#allocation2], 40
    %875 = vst.msk [vmem:[%s874] sm:$0xff] %vm229, %v872
    %v876 = vsel %vm229, %v872, 0
    %878 = vmatprep.subr.mxu0 0.0
    %879 = vmatpush1.msra.mxu0 0.0
    %880 = vmatprep.subr.mxu0 0.0
    %881 = vmatpush1.msra.mxu0 0.0
    %882 = vmatprep.subr.mxu0 0.0
    %883 = vmatpush1.msra.mxu0 0.0
    %884 = vmatprep.subr.mxu0 0.0
    %885 = vmatpush1.msra.mxu0 0.0
    %886 = vmatprep.subr.mxu0 0.0
    %887 = vmatpush1.msra.mxu0 0.0
    %888 = vmatprep.subr.mxu0 0.0
    %889 = vmatpush1.msra.mxu0 0.0
    %890 = vmatprep.subr.mxu0 0.0
    %891 = vmatpush1.msra.mxu0 0.0
    %892 = vmatprep.subr.mxu0 0.0
    %893 = vmatpush1.msra.mxu0 0.0
    %894 = vmatprep.subr.mxu0 0.0
    %895 = vmatpush1.msra.mxu0 0.0
    %896 = vmatprep.subr.mxu0 0.0
    %897 = vmatpush1.msra.mxu0 0.0
    %898 = vmatprep.subr.mxu0 0.0
    %899 = vmatpush1.msra.mxu0 0.0
    %900 = vmatprep.subr.mxu0 0.0
    %901 = vmatpush1.msra.mxu0 0.0
    %902 = vmatprep.subr.mxu0 0.0
    %903 = vmatpush1.msra.mxu0 %v106
    %904 = vmatprep.subr.mxu0 0.0
    %905 = vmatpush1.msra.mxu0 %v105
    %906 = vmatprep.subr.mxu0 0.0
    %907 = vmatpush1.msra.mxu0 %v104
    %908 = vmatprep.subr.mxu0 0.0
    %909 = vmatpush1.msra.mxu0 %v103
    %910 = vmatprep.subr.mxu0 0.0
    %911 = vmatpush2.msra.mxu0 0.0
    %912 = vmatprep.subr.mxu0 0.0
    %913 = vmatpush2.msra.mxu0 0.0
    %914 = vmatprep.subr.mxu0 0.0
    %915 = vmatpush2.msra.mxu0 0.0
    %916 = vmatprep.subr.mxu0 0.0
    %917 = vmatpush2.msra.mxu0 0.0
    %918 = vmatprep.subr.mxu0 0.0
    %919 = vmatpush2.msra.mxu0 0.0
    %920 = vmatprep.subr.mxu0 0.0
    %921 = vmatpush2.msra.mxu0 0.0
    %922 = vmatprep.subr.mxu0 0.0
    %923 = vmatpush2.msra.mxu0 0.0
    %924 = vmatprep.subr.mxu0 0.0
    %925 = vmatpush2.msra.mxu0 0.0
    %926 = vmatprep.subr.mxu0 0.0
    %927 = vmatpush2.msra.mxu0 0.0
    %928 = vmatprep.subr.mxu0 0.0
    %929 = vmatpush2.msra.mxu0 0.0
    %930 = vmatprep.subr.mxu0 0.0
    %931 = vmatpush2.msra.mxu0 0.0
    %932 = vmatprep.subr.mxu0 0.0
    %933 = vmatpush2.msra.mxu0 0.0
    %934 = vmatprep.subr.mxu0 0.0
    %935 = vmatpush2.msra.mxu0 0.0
    %936 = vmatprep.subr.mxu0 0.0
    %937 = vmatpush2.msra.mxu0 0.0
    %938 = vmatprep.subr.mxu0 0.0
    %939 = vmatpush2.msra.mxu0 0.0
    %940 = vmatprep.subr.mxu0 0.0
    %941 = vmatpush2.msra.mxu0 0.0
    %942 = vmatprep.mubr.f32.mxu0 0.0
    %943 = vmatmul.mubr.f32.gmra.mxu0 %v876
    %v944 = vpop.f32.mrf.mxu0
    %v945 = vadd.f32 0.0, %v944
    %v946 = vpop.f32.mrf.mxu0
    %947 = vdwg.mxu0
    %v948 = vadd.f32 %v219, %v945
    %v949 = vmul.f32 %v948, 2.0
    %v950 = vsel %vm86, %v949, %v948
    %v951 = vxor.u32 %v950, 2147483648
    %v952 = vmul.f32 %v951, 1.442695
    %v953 = vpow.pop %v952
    %v954 = vadd.f32 %v953, 1.0
    %v955 = vrcp.pop %v954
    %v956 = vmul.f32 1.0, %v955
    %v957 = vmul.f32 %v956, 2.0
    %v958 = vsub.f32 %v957, 1.0
    %v959 = vsel %vm86, %v958, %v956
    %v960 = vmul.f32 %v959, %v863
    %962 = vrot.lane.b32.xlu0 %v959, 64
    %v963 = vpop.permute.xlu0 %962
    %v965 = vmul.f32 %v959, %v963
    %967 = vrot.lane.b32.xlu0 %v965, 32
    %v968 = vpop.permute.xlu0 %967
    %v970 = vadd.f32 %v960, %v968
    %v971 = vtanh.pop %v970
    %973 = vrot.lane.b32.xlu0 %v971, 64
    %v974 = vpop.permute.xlu0 %973
    %v976 = vmul.f32 %v959, %v974
    %978 = vrot.lane.b32.xlu0 %v976, 32
    %v979 = vpop.permute.xlu0 %978
    %s981 = scalar_lea.vmem [#allocation2], 48
    %982 = vst.msk [vmem:[%s981] sm:$0xff] %vm229, %v979
    %v983 = vsel %vm229, %v979, 0
    %985 = vmatprep.subr.mxu0 0.0
    %986 = vmatpush1.msra.mxu0 0.0
    %987 = vmatprep.subr.mxu0 0.0
    %988 = vmatpush1.msra.mxu0 0.0
    %989 = vmatprep.subr.mxu0 0.0
    %990 = vmatpush1.msra.mxu0 0.0
    %991 = vmatprep.subr.mxu0 0.0
    %992 = vmatpush1.msra.mxu0 0.0
    %993 = vmatprep.subr.mxu0 0.0
    %994 = vmatpush1.msra.mxu0 0.0
    %995 = vmatprep.subr.mxu0 0.0
    %996 = vmatpush1.msra.mxu0 0.0
    %997 = vmatprep.subr.mxu0 0.0
    %998 = vmatpush1.msra.mxu0 0.0
    %999 = vmatprep.subr.mxu0 0.0
    %1000 = vmatpush1.msra.mxu0 0.0
    %1001 = vmatprep.subr.mxu0 0.0
    %1002 = vmatpush1.msra.mxu0 0.0
    %1003 = vmatprep.subr.mxu0 0.0
    %1004 = vmatpush1.msra.mxu0 0.0
    %1005 = vmatprep.subr.mxu0 0.0
    %1006 = vmatpush1.msra.mxu0 0.0
    %1007 = vmatprep.subr.mxu0 0.0
    %1008 = vmatpush1.msra.mxu0 0.0
    %1009 = vmatprep.subr.mxu0 0.0
    %1010 = vmatpush1.msra.mxu0 %v106
    %1011 = vmatprep.subr.mxu0 0.0
    %1012 = vmatpush1.msra.mxu0 %v105
    %1013 = vmatprep.subr.mxu0 0.0
    %1014 = vmatpush1.msra.mxu0 %v104
    %1015 = vmatprep.subr.mxu0 0.0
    %1016 = vmatpush1.msra.mxu0 %v103
    %1017 = vmatprep.subr.mxu0 0.0
    %1018 = vmatpush2.msra.mxu0 0.0
    %1019 = vmatprep.subr.mxu0 0.0
    %1020 = vmatpush2.msra.mxu0 0.0
    %1021 = vmatprep.subr.mxu0 0.0
    %1022 = vmatpush2.msra.mxu0 0.0
    %1023 = vmatprep.subr.mxu0 0.0
    %1024 = vmatpush2.msra.mxu0 0.0
    %1025 = vmatprep.subr.mxu0 0.0
    %1026 = vmatpush2.msra.mxu0 0.0
    %1027 = vmatprep.subr.mxu0 0.0
    %1028 = vmatpush2.msra.mxu0 0.0
    %1029 = vmatprep.subr.mxu0 0.0
    %1030 = vmatpush2.msra.mxu0 0.0
    %1031 = vmatprep.subr.mxu0 0.0
    %1032 = vmatpush2.msra.mxu0 0.0
    %1033 = vmatprep.subr.mxu0 0.0
    %1034 = vmatpush2.msra.mxu0 0.0
    %1035 = vmatprep.subr.mxu0 0.0
    %1036 = vmatpush2.msra.mxu0 0.0
    %1037 = vmatprep.subr.mxu0 0.0
    %1038 = vmatpush2.msra.mxu0 0.0
    %1039 = vmatprep.subr.mxu0 0.0
    %1040 = vmatpush2.msra.mxu0 0.0
    %1041 = vmatprep.subr.mxu0 0.0
    %1042 = vmatpush2.msra.mxu0 0.0
    %1043 = vmatprep.subr.mxu0 0.0
    %1044 = vmatpush2.msra.mxu0 0.0
    %1045 = vmatprep.subr.mxu0 0.0
    %1046 = vmatpush2.msra.mxu0 0.0
    %1047 = vmatprep.subr.mxu0 0.0
    %1048 = vmatpush2.msra.mxu0 0.0
    %1049 = vmatprep.mubr.f32.mxu0 0.0
    %1050 = vmatmul.mubr.f32.gmra.mxu0 %v983
    %v1051 = vpop.f32.mrf.mxu0
    %v1052 = vadd.f32 0.0, %v1051
    %v1053 = vpop.f32.mrf.mxu0
    %1054 = vdwg.mxu0
    %v1055 = vadd.f32 %v224, %v1052
    %v1056 = vmul.f32 %v1055, 2.0
    %v1057 = vsel %vm86, %v1056, %v1055
    %v1058 = vxor.u32 %v1057, 2147483648
    %v1059 = vmul.f32 %v1058, 1.442695
    %v1060 = vpow.pop %v1059
    %v1061 = vadd.f32 %v1060, 1.0
    %v1062 = vrcp.pop %v1061
    %v1063 = vmul.f32 1.0, %v1062
    %v1064 = vmul.f32 %v1063, 2.0
    %v1065 = vsub.f32 %v1064, 1.0
    %v1066 = vsel %vm86, %v1065, %v1063
    %v1067 = vmul.f32 %v1066, %v970
    %1069 = vrot.lane.b32.xlu0 %v1066, 64
    %v1070 = vpop.permute.xlu0 %1069
    %v1072 = vmul.f32 %v1066, %v1070
    %1074 = vrot.lane.b32.xlu0 %v1072, 32
    %v1075 = vpop.permute.xlu0 %1074
    %v1077 = vadd.f32 %v1067, %v1075
    %v1078 = vtanh.pop %v1077
    %1080 = vrot.lane.b32.xlu0 %v1078, 64
    %v1081 = vpop.permute.xlu0 %1080
    %v1083 = vmul.f32 %v1066, %v1081
    %1085 = vrot.lane.b32.xlu0 %v1083, 32
    %v1086 = vpop.permute.xlu0 %1085
    %s1088 = scalar_lea.vmem [#allocation2], 56
    %1089 = vst.msk [vmem:[%s1088] sm:$0xff] %vm229, %v1086
    %1090 = vst.msk [vmem:[%s12] sm:$0xff] %vm229, %v1086
    %1092 = vrot.lane.b32.xlu0 %v1077, 96
    %v1093 = vpop.permute.xlu0 %1092
    %1095 = vst.msk [vmem:[%s13] sm:$0xff] %vm229, %v1093
    %v1096 = vld [vmem:[#allocation3] sm:$0xff]
    %v1097 = vld [vmem:[#allocation3 + $0x8] sm:$0xff]
    %v1098 = vld [vmem:[#allocation3 + $0x10] sm:$0xff]
    %v1099 = vld [vmem:[#allocation3 + $0x18] sm:$0xff]
    %v1100 = vld [vmem:[#allocation5] sm:$0xff]
    %v1101 = vld [vmem:[#allocation5 + $0x8] sm:$0xff]
    %v1102 = vld [vmem:[#allocation5 + $0x10] sm:$0xff]
    %v1103 = vld [vmem:[#allocation5 + $0x18] sm:$0xff]
    %v1104 = vld [vmem:[%s8] sm:$0x1]
    %v1105 = vld [vmem:[#allocation2] sm:$0xff]
    %v1106 = vld [vmem:[#allocation2 + $0x8] sm:$0xff]
    %v1107 = vld [vmem:[#allocation2 + $0x10] sm:$0xff]
    %v1108 = vld [vmem:[#allocation2 + $0x18] sm:$0xff]
    %v1109 = vld [vmem:[#allocation2 + $0x20] sm:$0xff]
    %v1110 = vld [vmem:[#allocation2 + $0x28] sm:$0xff]
    %v1111 = vld [vmem:[#allocation2 + $0x30] sm:$0xff]
    %v1112 = vld [vmem:[#allocation2 + $0x38] sm:$0xff]
    %v1114 = vlaneseq
    %v1115 = vshrl.u32 %v1114, 7
    %v1116 = vsub.s32 0, %v1115
    %v1117 = vrot.slane %v1104, %v1116
    %v1120 = vsel %vm229, %v1105, 0
    %v1123 = vsel %vm229, %v1106, 0
    %v1126 = vsel %vm229, %v1107, 0
    %v1129 = vsel %vm229, %v1108, 0
    %v1132 = vsel %vm229, %v1109, 0
    %v1135 = vsel %vm229, %v1110, 0
    %v1138 = vsel %vm229, %v1111, 0
    %v1141 = vsel %vm229, %v1112, 0
    %1143 = vmatprep.subr.mxu0 0.0
    %1144 = vmatpush1.msra.mxu0 0.0
    %1145 = vmatprep.subr.mxu0 0.0
    %1146 = vmatpush1.msra.mxu0 0.0
    %1147 = vmatprep.subr.mxu0 0.0
    %1148 = vmatpush1.msra.mxu0 0.0
    %1149 = vmatprep.subr.mxu0 0.0
    %1150 = vmatpush1.msra.mxu0 0.0
    %1151 = vmatprep.subr.mxu0 0.0
    %1152 = vmatpush1.msra.mxu0 0.0
    %1153 = vmatprep.subr.mxu0 0.0
    %1154 = vmatpush1.msra.mxu0 0.0
    %1155 = vmatprep.subr.mxu0 0.0
    %1156 = vmatpush1.msra.mxu0 0.0
    %1157 = vmatprep.subr.mxu0 0.0
    %1158 = vmatpush1.msra.mxu0 0.0
    %1159 = vmatprep.subr.mxu0 0.0
    %1160 = vmatpush1.msra.mxu0 0.0
    %1161 = vmatprep.subr.mxu0 0.0
    %1162 = vmatpush1.msra.mxu0 0.0
    %1163 = vmatprep.subr.mxu0 0.0
    %1164 = vmatpush1.msra.mxu0 0.0
    %1165 = vmatprep.subr.mxu0 0.0
    %1166 = vmatpush1.msra.mxu0 0.0
    %1167 = vmatprep.subr.mxu0 0.0
    %1168 = vmatpush1.msra.mxu0 %v1099
    %1169 = vmatprep.subr.mxu0 0.0
    %1170 = vmatpush1.msra.mxu0 %v1098
    %1171 = vmatprep.subr.mxu0 0.0
    %1172 = vmatpush1.msra.mxu0 %v1097
    %1173 = vmatprep.subr.mxu0 0.0
    %1174 = vmatpush1.msra.mxu0 %v1096
    %1175 = vmatprep.subr.mxu0 0.0
    %1176 = vmatpush2.msra.mxu0 0.0
    %1177 = vmatprep.subr.mxu0 0.0
    %1178 = vmatpush2.msra.mxu0 0.0
    %1179 = vmatprep.subr.mxu0 0.0
    %1180 = vmatpush2.msra.mxu0 0.0
    %1181 = vmatprep.subr.mxu0 0.0
    %1182 = vmatpush2.msra.mxu0 0.0
    %1183 = vmatprep.subr.mxu0 0.0
    %1184 = vmatpush2.msra.mxu0 0.0
    %1185 = vmatprep.subr.mxu0 0.0
    %1186 = vmatpush2.msra.mxu0 0.0
    %1187 = vmatprep.subr.mxu0 0.0
    %1188 = vmatpush2.msra.mxu0 0.0
    %1189 = vmatprep.subr.mxu0 0.0
    %1190 = vmatpush2.msra.mxu0 0.0
    %1191 = vmatprep.subr.mxu0 0.0
    %1192 = vmatpush2.msra.mxu0 0.0
    %1193 = vmatprep.subr.mxu0 0.0
    %1194 = vmatpush2.msra.mxu0 0.0
    %1195 = vmatprep.subr.mxu0 0.0
    %1196 = vmatpush2.msra.mxu0 0.0
    %1197 = vmatprep.subr.mxu0 0.0
    %1198 = vmatpush2.msra.mxu0 0.0
    %1199 = vmatprep.subr.mxu0 0.0
    %1200 = vmatpush2.msra.mxu0 0.0
    %1201 = vmatprep.subr.mxu0 0.0
    %1202 = vmatpush2.msra.mxu0 0.0
    %1203 = vmatprep.subr.mxu0 0.0
    %1204 = vmatpush2.msra.mxu0 0.0
    %1205 = vmatprep.subr.mxu0 0.0
    %1206 = vmatpush2.msra.mxu0 0.0
    %1207 = vmatprep.mubr.f32.mxu0 0.0
    %1208 = vmatmul.mubr.f32.gmra.mxu0 %v1120
    %v1209 = vpop.f32.mrf.mxu0
    %v1210 = vadd.f32 %v1117, %v1209
    %v1211 = vpop.f32.mrf.mxu0
    %1212 = vmatprep.mubr.f32.mxu0 0.0
    %1213 = vmatmul.mubr.f32.gmra.mxu0 %v1123
    %v1214 = vpop.f32.mrf.mxu0
    %v1215 = vadd.f32 %v1117, %v1214
    %v1216 = vpop.f32.mrf.mxu0
    %1217 = vmatprep.mubr.f32.mxu0 0.0
    %1218 = vmatmul.mubr.f32.gmra.mxu0 %v1126
    %v1219 = vpop.f32.mrf.mxu0
    %v1220 = vadd.f32 %v1117, %v1219
    %v1221 = vpop.f32.mrf.mxu0
    %1222 = vmatprep.mubr.f32.mxu0 0.0
    %1223 = vmatmul.mubr.f32.gmra.mxu0 %v1129
    %v1224 = vpop.f32.mrf.mxu0
    %v1225 = vadd.f32 %v1117, %v1224
    %v1226 = vpop.f32.mrf.mxu0
    %1227 = vmatprep.mubr.f32.mxu0 0.0
    %1228 = vmatmul.mubr.f32.gmra.mxu0 %v1132
    %v1229 = vpop.f32.mrf.mxu0
    %v1230 = vadd.f32 %v1117, %v1229
    %v1231 = vpop.f32.mrf.mxu0
    %1232 = vmatprep.mubr.f32.mxu0 0.0
    %1233 = vmatmul.mubr.f32.gmra.mxu0 %v1135
    %v1234 = vpop.f32.mrf.mxu0
    %v1235 = vadd.f32 %v1117, %v1234
    %v1236 = vpop.f32.mrf.mxu0
    %1237 = vmatprep.mubr.f32.mxu0 0.0
    %1238 = vmatmul.mubr.f32.gmra.mxu0 %v1138
    %v1239 = vpop.f32.mrf.mxu0
    %v1240 = vadd.f32 %v1117, %v1239
    %v1241 = vpop.f32.mrf.mxu0
    %1242 = vmatprep.mubr.f32.mxu0 0.0
    %1243 = vmatmul.mubr.f32.gmra.mxu0 %v1141
    %v1244 = vpop.f32.mrf.mxu0
    %v1245 = vadd.f32 %v1117, %v1244
    %v1246 = vpop.f32.mrf.mxu0
    %1247 = vdwg.mxu0
    %s1248 = scalar_lea.vmem %s1, 8
    %v1249 = vld [vmem:[%s1248] sm:$0xff]
    %s1250 = scalar_lea.vmem %s2, 8
    %v1251 = vld [vmem:[%s1250] sm:$0xff]
    %v1253 = vsel %vm229, %v1249, 0
    %1255 = vmatprep.subr.mxu0 0.0
    %1256 = vmatpush1.msra.mxu0 0.0
    %1257 = vmatprep.subr.mxu0 0.0
    %1258 = vmatpush1.msra.mxu0 0.0
    %1259 = vmatprep.subr.mxu0 0.0
    %1260 = vmatpush1.msra.mxu0 0.0
    %1261 = vmatprep.subr.mxu0 0.0
    %1262 = vmatpush1.msra.mxu0 0.0
    %1263 = vmatprep.subr.mxu0 0.0
    %1264 = vmatpush1.msra.mxu0 0.0
    %1265 = vmatprep.subr.mxu0 0.0
    %1266 = vmatpush1.msra.mxu0 0.0
    %1267 = vmatprep.subr.mxu0 0.0
    %1268 = vmatpush1.msra.mxu0 0.0
    %1269 = vmatprep.subr.mxu0 0.0
    %1270 = vmatpush1.msra.mxu0 0.0
    %1271 = vmatprep.subr.mxu0 0.0
    %1272 = vmatpush1.msra.mxu0 0.0
    %1273 = vmatprep.subr.mxu0 0.0
    %1274 = vmatpush1.msra.mxu0 0.0
    %1275 = vmatprep.subr.mxu0 0.0
    %1276 = vmatpush1.msra.mxu0 0.0
    %1277 = vmatprep.subr.mxu0 0.0
    %1278 = vmatpush1.msra.mxu0 0.0
    %1279 = vmatprep.subr.mxu0 0.0
    %1280 = vmatpush1.msra.mxu0 %v1103
    %1281 = vmatprep.subr.mxu0 0.0
    %1282 = vmatpush1.msra.mxu0 %v1102
    %1283 = vmatprep.subr.mxu0 0.0
    %1284 = vmatpush1.msra.mxu0 %v1101
    %1285 = vmatprep.subr.mxu0 0.0
    %1286 = vmatpush1.msra.mxu0 %v1100
    %1287 = vmatprep.subr.mxu0 0.0
    %1288 = vmatpush2.msra.mxu0 0.0
    %1289 = vmatprep.subr.mxu0 0.0
    %1290 = vmatpush2.msra.mxu0 0.0
    %1291 = vmatprep.subr.mxu0 0.0
    %1292 = vmatpush2.msra.mxu0 0.0
    %1293 = vmatprep.subr.mxu0 0.0
    %1294 = vmatpush2.msra.mxu0 0.0
    %1295 = vmatprep.subr.mxu0 0.0
    %1296 = vmatpush2.msra.mxu0 0.0
    %1297 = vmatprep.subr.mxu0 0.0
    %1298 = vmatpush2.msra.mxu0 0.0
    %1299 = vmatprep.subr.mxu0 0.0
    %1300 = vmatpush2.msra.mxu0 0.0
    %1301 = vmatprep.subr.mxu0 0.0
    %1302 = vmatpush2.msra.mxu0 0.0
    %1303 = vmatprep.subr.mxu0 0.0
    %1304 = vmatpush2.msra.mxu0 0.0
    %1305 = vmatprep.subr.mxu0 0.0
    %1306 = vmatpush2.msra.mxu0 0.0
    %1307 = vmatprep.subr.mxu0 0.0
    %1308 = vmatpush2.msra.mxu0 0.0
    %1309 = vmatprep.subr.mxu0 0.0
    %1310 = vmatpush2.msra.mxu0 0.0
    %1311 = vmatprep.subr.mxu0 0.0
    %1312 = vmatpush2.msra.mxu0 0.0
    %1313 = vmatprep.subr.mxu0 0.0
    %1314 = vmatpush2.msra.mxu0 0.0
    %1315 = vmatprep.subr.mxu0 0.0
    %1316 = vmatpush2.msra.mxu0 0.0
    %1317 = vmatprep.subr.mxu0 0.0
    %1318 = vmatpush2.msra.mxu0 0.0
    %1319 = vmatprep.mubr.f32.mxu0 0.0
    %1320 = vmatmul.mubr.f32.gmra.mxu0 %v1253
    %v1321 = vpop.f32.mrf.mxu0
    %v1322 = vadd.f32 0.0, %v1321
    %v1323 = vpop.f32.mrf.mxu0
    %1324 = vdwg.mxu0
    %v1325 = vadd.f32 %v1210, %v1322
    %v1326 = vmul.f32 %v1325, 2.0
    %v1327 = vsel %vm86, %v1326, %v1325
    %v1328 = vxor.u32 %v1327, 2147483648
    %v1329 = vmul.f32 %v1328, 1.442695
    %v1330 = vpow.pop %v1329
    %v1331 = vadd.f32 %v1330, 1.0
    %v1332 = vrcp.pop %v1331
    %v1333 = vmul.f32 1.0, %v1332
    %v1334 = vmul.f32 %v1333, 2.0
    %v1335 = vsub.f32 %v1334, 1.0
    %v1336 = vsel %vm86, %v1335, %v1333
    %1338 = vrot.lane.b32.xlu0 %v1251, 32
    %v1339 = vpop.permute.xlu0 %1338
    %v1341 = vmul.f32 %v1336, %v1339
    %1343 = vrot.lane.b32.xlu0 %v1336, 64
    %v1344 = vpop.permute.xlu0 %1343
    %v1346 = vmul.f32 %v1336, %v1344
    %1348 = vrot.lane.b32.xlu0 %v1346, 32
    %v1349 = vpop.permute.xlu0 %1348
    %v1351 = vadd.f32 %v1341, %v1349
    %v1352 = vtanh.pop %v1351
    %1354 = vrot.lane.b32.xlu0 %v1352, 64
    %v1355 = vpop.permute.xlu0 %1354
    %v1357 = vmul.f32 %v1336, %v1355
    %1359 = vrot.lane.b32.xlu0 %v1357, 32
    %v1360 = vpop.permute.xlu0 %1359
    %v1361 = vsel %vm229, %v1360, 0
    %1363 = vmatprep.subr.mxu0 0.0
    %1364 = vmatpush1.msra.mxu0 0.0
    %1365 = vmatprep.subr.mxu0 0.0
    %1366 = vmatpush1.msra.mxu0 0.0
    %1367 = vmatprep.subr.mxu0 0.0
    %1368 = vmatpush1.msra.mxu0 0.0
    %1369 = vmatprep.subr.mxu0 0.0
    %1370 = vmatpush1.msra.mxu0 0.0
    %1371 = vmatprep.subr.mxu0 0.0
    %1372 = vmatpush1.msra.mxu0 0.0
    %1373 = vmatprep.subr.mxu0 0.0
    %1374 = vmatpush1.msra.mxu0 0.0
    %1375 = vmatprep.subr.mxu0 0.0
    %1376 = vmatpush1.msra.mxu0 0.0
    %1377 = vmatprep.subr.mxu0 0.0
    %1378 = vmatpush1.msra.mxu0 0.0
    %1379 = vmatprep.subr.mxu0 0.0
    %1380 = vmatpush1.msra.mxu0 0.0
    %1381 = vmatprep.subr.mxu0 0.0
    %1382 = vmatpush1.msra.mxu0 0.0
    %1383 = vmatprep.subr.mxu0 0.0
    %1384 = vmatpush1.msra.mxu0 0.0
    %1385 = vmatprep.subr.mxu0 0.0
    %1386 = vmatpush1.msra.mxu0 0.0
    %1387 = vmatprep.subr.mxu0 0.0
    %1388 = vmatpush1.msra.mxu0 %v1103
    %1389 = vmatprep.subr.mxu0 0.0
    %1390 = vmatpush1.msra.mxu0 %v1102
    %1391 = vmatprep.subr.mxu0 0.0
    %1392 = vmatpush1.msra.mxu0 %v1101
    %1393 = vmatprep.subr.mxu0 0.0
    %1394 = vmatpush1.msra.mxu0 %v1100
    %1395 = vmatprep.subr.mxu0 0.0
    %1396 = vmatpush2.msra.mxu0 0.0
    %1397 = vmatprep.subr.mxu0 0.0
    %1398 = vmatpush2.msra.mxu0 0.0
    %1399 = vmatprep.subr.mxu0 0.0
    %1400 = vmatpush2.msra.mxu0 0.0
    %1401 = vmatprep.subr.mxu0 0.0
    %1402 = vmatpush2.msra.mxu0 0.0
    %1403 = vmatprep.subr.mxu0 0.0
    %1404 = vmatpush2.msra.mxu0 0.0
    %1405 = vmatprep.subr.mxu0 0.0
    %1406 = vmatpush2.msra.mxu0 0.0
    %1407 = vmatprep.subr.mxu0 0.0
    %1408 = vmatpush2.msra.mxu0 0.0
    %1409 = vmatprep.subr.mxu0 0.0
    %1410 = vmatpush2.msra.mxu0 0.0
    %1411 = vmatprep.subr.mxu0 0.0
    %1412 = vmatpush2.msra.mxu0 0.0
    %1413 = vmatprep.subr.mxu0 0.0
    %1414 = vmatpush2.msra.mxu0 0.0
    %1415 = vmatprep.subr.mxu0 0.0
    %1416 = vmatpush2.msra.mxu0 0.0
    %1417 = vmatprep.subr.mxu0 0.0
    %1418 = vmatpush2.msra.mxu0 0.0
    %1419 = vmatprep.subr.mxu0 0.0
    %1420 = vmatpush2.msra.mxu0 0.0
    %1421 = vmatprep.subr.mxu0 0.0
    %1422 = vmatpush2.msra.mxu0 0.0
    %1423 = vmatprep.subr.mxu0 0.0
    %1424 = vmatpush2.msra.mxu0 0.0
    %1425 = vmatprep.subr.mxu0 0.0
    %1426 = vmatpush2.msra.mxu0 0.0
    %1427 = vmatprep.mubr.f32.mxu0 0.0
    %1428 = vmatmul.mubr.f32.gmra.mxu0 %v1361
    %v1429 = vpop.f32.mrf.mxu0
    %v1430 = vadd.f32 0.0, %v1429
    %v1431 = vpop.f32.mrf.mxu0
    %1432 = vdwg.mxu0
    %v1433 = vadd.f32 %v1215, %v1430
    %v1434 = vmul.f32 %v1433, 2.0
    %v1435 = vsel %vm86, %v1434, %v1433
    %v1436 = vxor.u32 %v1435, 2147483648
    %v1437 = vmul.f32 %v1436, 1.442695
    %v1438 = vpow.pop %v1437
    %v1439 = vadd.f32 %v1438, 1.0
    %v1440 = vrcp.pop %v1439
    %v1441 = vmul.f32 1.0, %v1440
    %v1442 = vmul.f32 %v1441, 2.0
    %v1443 = vsub.f32 %v1442, 1.0
    %v1444 = vsel %vm86, %v1443, %v1441
    %v1445 = vmul.f32 %v1444, %v1351
    %1447 = vrot.lane.b32.xlu0 %v1444, 64
    %v1448 = vpop.permute.xlu0 %1447
    %v1450 = vmul.f32 %v1444, %v1448
    %1452 = vrot.lane.b32.xlu0 %v1450, 32
    %v1453 = vpop.permute.xlu0 %1452
    %v1455 = vadd.f32 %v1445, %v1453
    %v1456 = vtanh.pop %v1455
    %1458 = vrot.lane.b32.xlu0 %v1456, 64
    %v1459 = vpop.permute.xlu0 %1458
    %v1461 = vmul.f32 %v1444, %v1459
    %1463 = vrot.lane.b32.xlu0 %v1461, 32
    %v1464 = vpop.permute.xlu0 %1463
    %v1465 = vsel %vm229, %v1464, 0
    %1467 = vmatprep.subr.mxu0 0.0
    %1468 = vmatpush1.msra.mxu0 0.0
    %1469 = vmatprep.subr.mxu0 0.0
    %1470 = vmatpush1.msra.mxu0 0.0
    %1471 = vmatprep.subr.mxu0 0.0
    %1472 = vmatpush1.msra.mxu0 0.0
    %1473 = vmatprep.subr.mxu0 0.0
    %1474 = vmatpush1.msra.mxu0 0.0
    %1475 = vmatprep.subr.mxu0 0.0
    %1476 = vmatpush1.msra.mxu0 0.0
    %1477 = vmatprep.subr.mxu0 0.0
    %1478 = vmatpush1.msra.mxu0 0.0
    %1479 = vmatprep.subr.mxu0 0.0
    %1480 = vmatpush1.msra.mxu0 0.0
    %1481 = vmatprep.subr.mxu0 0.0
    %1482 = vmatpush1.msra.mxu0 0.0
    %1483 = vmatprep.subr.mxu0 0.0
    %1484 = vmatpush1.msra.mxu0 0.0
    %1485 = vmatprep.subr.mxu0 0.0
    %1486 = vmatpush1.msra.mxu0 0.0
    %1487 = vmatprep.subr.mxu0 0.0
    %1488 = vmatpush1.msra.mxu0 0.0
    %1489 = vmatprep.subr.mxu0 0.0
    %1490 = vmatpush1.msra.mxu0 0.0
    %1491 = vmatprep.subr.mxu0 0.0
    %1492 = vmatpush1.msra.mxu0 %v1103
    %1493 = vmatprep.subr.mxu0 0.0
    %1494 = vmatpush1.msra.mxu0 %v1102
    %1495 = vmatprep.subr.mxu0 0.0
    %1496 = vmatpush1.msra.mxu0 %v1101
    %1497 = vmatprep.subr.mxu0 0.0
    %1498 = vmatpush1.msra.mxu0 %v1100
    %1499 = vmatprep.subr.mxu0 0.0
    %1500 = vmatpush2.msra.mxu0 0.0
    %1501 = vmatprep.subr.mxu0 0.0
    %1502 = vmatpush2.msra.mxu0 0.0
    %1503 = vmatprep.subr.mxu0 0.0
    %1504 = vmatpush2.msra.mxu0 0.0
    %1505 = vmatprep.subr.mxu0 0.0
    %1506 = vmatpush2.msra.mxu0 0.0
    %1507 = vmatprep.subr.mxu0 0.0
    %1508 = vmatpush2.msra.mxu0 0.0
    %1509 = vmatprep.subr.mxu0 0.0
    %1510 = vmatpush2.msra.mxu0 0.0
    %1511 = vmatprep.subr.mxu0 0.0
    %1512 = vmatpush2.msra.mxu0 0.0
    %1513 = vmatprep.subr.mxu0 0.0
    %1514 = vmatpush2.msra.mxu0 0.0
    %1515 = vmatprep.subr.mxu0 0.0
    %1516 = vmatpush2.msra.mxu0 0.0
    %1517 = vmatprep.subr.mxu0 0.0
    %1518 = vmatpush2.msra.mxu0 0.0
    %1519 = vmatprep.subr.mxu0 0.0
    %1520 = vmatpush2.msra.mxu0 0.0
    %1521 = vmatprep.subr.mxu0 0.0
    %1522 = vmatpush2.msra.mxu0 0.0
    %1523 = vmatprep.subr.mxu0 0.0
    %1524 = vmatpush2.msra.mxu0 0.0
    %1525 = vmatprep.subr.mxu0 0.0
    %1526 = vmatpush2.msra.mxu0 0.0
    %1527 = vmatprep.subr.mxu0 0.0
    %1528 = vmatpush2.msra.mxu0 0.0
    %1529 = vmatprep.subr.mxu0 0.0
    %1530 = vmatpush2.msra.mxu0 0.0
    %1531 = vmatprep.mubr.f32.mxu0 0.0
    %1532 = vmatmul.mubr.f32.gmra.mxu0 %v1465
    %v1533 = vpop.f32.mrf.mxu0
    %v1534 = vadd.f32 0.0, %v1533
    %v1535 = vpop.f32.mrf.mxu0
    %1536 = vdwg.mxu0
    %v1537 = vadd.f32 %v1220, %v1534
    %v1538 = vmul.f32 %v1537, 2.0
    %v1539 = vsel %vm86, %v1538, %v1537
    %v1540 = vxor.u32 %v1539, 2147483648
    %v1541 = vmul.f32 %v1540, 1.442695
    %v1542 = vpow.pop %v1541
    %v1543 = vadd.f32 %v1542, 1.0
    %v1544 = vrcp.pop %v1543
    %v1545 = vmul.f32 1.0, %v1544
    %v1546 = vmul.f32 %v1545, 2.0
    %v1547 = vsub.f32 %v1546, 1.0
    %v1548 = vsel %vm86, %v1547, %v1545
    %v1549 = vmul.f32 %v1548, %v1455
    %1551 = vrot.lane.b32.xlu0 %v1548, 64
    %v1552 = vpop.permute.xlu0 %1551
    %v1554 = vmul.f32 %v1548, %v1552
    %1556 = vrot.lane.b32.xlu0 %v1554, 32
    %v1557 = vpop.permute.xlu0 %1556
    %v1559 = vadd.f32 %v1549, %v1557
    %v1560 = vtanh.pop %v1559
    %1562 = vrot.lane.b32.xlu0 %v1560, 64
    %v1563 = vpop.permute.xlu0 %1562
    %v1565 = vmul.f32 %v1548, %v1563
    %1567 = vrot.lane.b32.xlu0 %v1565, 32
    %v1568 = vpop.permute.xlu0 %1567
    %v1569 = vsel %vm229, %v1568, 0
    %1571 = vmatprep.subr.mxu0 0.0
    %1572 = vmatpush1.msra.mxu0 0.0
    %1573 = vmatprep.subr.mxu0 0.0
    %1574 = vmatpush1.msra.mxu0 0.0
    %1575 = vmatprep.subr.mxu0 0.0
    %1576 = vmatpush1.msra.mxu0 0.0
    %1577 = vmatprep.subr.mxu0 0.0
    %1578 = vmatpush1.msra.mxu0 0.0
    %1579 = vmatprep.subr.mxu0 0.0
    %1580 = vmatpush1.msra.mxu0 0.0
    %1581 = vmatprep.subr.mxu0 0.0
    %1582 = vmatpush1.msra.mxu0 0.0
    %1583 = vmatprep.subr.mxu0 0.0
    %1584 = vmatpush1.msra.mxu0 0.0
    %1585 = vmatprep.subr.mxu0 0.0
    %1586 = vmatpush1.msra.mxu0 0.0
    %1587 = vmatprep.subr.mxu0 0.0
    %1588 = vmatpush1.msra.mxu0 0.0
    %1589 = vmatprep.subr.mxu0 0.0
    %1590 = vmatpush1.msra.mxu0 0.0
    %1591 = vmatprep.subr.mxu0 0.0
    %1592 = vmatpush1.msra.mxu0 0.0
    %1593 = vmatprep.subr.mxu0 0.0
    %1594 = vmatpush1.msra.mxu0 0.0
    %1595 = vmatprep.subr.mxu0 0.0
    %1596 = vmatpush1.msra.mxu0 %v1103
    %1597 = vmatprep.subr.mxu0 0.0
    %1598 = vmatpush1.msra.mxu0 %v1102
    %1599 = vmatprep.subr.mxu0 0.0
    %1600 = vmatpush1.msra.mxu0 %v1101
    %1601 = vmatprep.subr.mxu0 0.0
    %1602 = vmatpush1.msra.mxu0 %v1100
    %1603 = vmatprep.subr.mxu0 0.0
    %1604 = vmatpush2.msra.mxu0 0.0
    %1605 = vmatprep.subr.mxu0 0.0
    %1606 = vmatpush2.msra.mxu0 0.0
    %1607 = vmatprep.subr.mxu0 0.0
    %1608 = vmatpush2.msra.mxu0 0.0
    %1609 = vmatprep.subr.mxu0 0.0
    %1610 = vmatpush2.msra.mxu0 0.0
    %1611 = vmatprep.subr.mxu0 0.0
    %1612 = vmatpush2.msra.mxu0 0.0
    %1613 = vmatprep.subr.mxu0 0.0
    %1614 = vmatpush2.msra.mxu0 0.0
    %1615 = vmatprep.subr.mxu0 0.0
    %1616 = vmatpush2.msra.mxu0 0.0
    %1617 = vmatprep.subr.mxu0 0.0
    %1618 = vmatpush2.msra.mxu0 0.0
    %1619 = vmatprep.subr.mxu0 0.0
    %1620 = vmatpush2.msra.mxu0 0.0
    %1621 = vmatprep.subr.mxu0 0.0
    %1622 = vmatpush2.msra.mxu0 0.0
    %1623 = vmatprep.subr.mxu0 0.0
    %1624 = vmatpush2.msra.mxu0 0.0
    %1625 = vmatprep.subr.mxu0 0.0
    %1626 = vmatpush2.msra.mxu0 0.0
    %1627 = vmatprep.subr.mxu0 0.0
    %1628 = vmatpush2.msra.mxu0 0.0
    %1629 = vmatprep.subr.mxu0 0.0
    %1630 = vmatpush2.msra.mxu0 0.0
    %1631 = vmatprep.subr.mxu0 0.0
    %1632 = vmatpush2.msra.mxu0 0.0
    %1633 = vmatprep.subr.mxu0 0.0
    %1634 = vmatpush2.msra.mxu0 0.0
    %1635 = vmatprep.mubr.f32.mxu0 0.0
    %1636 = vmatmul.mubr.f32.gmra.mxu0 %v1569
    %v1637 = vpop.f32.mrf.mxu0
    %v1638 = vadd.f32 0.0, %v1637
    %v1639 = vpop.f32.mrf.mxu0
    %1640 = vdwg.mxu0
    %v1641 = vadd.f32 %v1225, %v1638
    %v1642 = vmul.f32 %v1641, 2.0
    %v1643 = vsel %vm86, %v1642, %v1641
    %v1644 = vxor.u32 %v1643, 2147483648
    %v1645 = vmul.f32 %v1644, 1.442695
    %v1646 = vpow.pop %v1645
    %v1647 = vadd.f32 %v1646, 1.0
    %v1648 = vrcp.pop %v1647
    %v1649 = vmul.f32 1.0, %v1648
    %v1650 = vmul.f32 %v1649, 2.0
    %v1651 = vsub.f32 %v1650, 1.0
    %v1652 = vsel %vm86, %v1651, %v1649
    %v1653 = vmul.f32 %v1652, %v1559
    %1655 = vrot.lane.b32.xlu0 %v1652, 64
    %v1656 = vpop.permute.xlu0 %1655
    %v1658 = vmul.f32 %v1652, %v1656
    %1660 = vrot.lane.b32.xlu0 %v1658, 32
    %v1661 = vpop.permute.xlu0 %1660
    %v1663 = vadd.f32 %v1653, %v1661
    %v1664 = vtanh.pop %v1663
    %1666 = vrot.lane.b32.xlu0 %v1664, 64
    %v1667 = vpop.permute.xlu0 %1666
    %v1669 = vmul.f32 %v1652, %v1667
    %1671 = vrot.lane.b32.xlu0 %v1669, 32
    %v1672 = vpop.permute.xlu0 %1671
    %v1673 = vsel %vm229, %v1672, 0
    %1675 = vmatprep.subr.mxu0 0.0
    %1676 = vmatpush1.msra.mxu0 0.0
    %1677 = vmatprep.subr.mxu0 0.0
    %1678 = vmatpush1.msra.mxu0 0.0
    %1679 = vmatprep.subr.mxu0 0.0
    %1680 = vmatpush1.msra.mxu0 0.0
    %1681 = vmatprep.subr.mxu0 0.0
    %1682 = vmatpush1.msra.mxu0 0.0
    %1683 = vmatprep.subr.mxu0 0.0
    %1684 = vmatpush1.msra.mxu0 0.0
    %1685 = vmatprep.subr.mxu0 0.0
    %1686 = vmatpush1.msra.mxu0 0.0
    %1687 = vmatprep.subr.mxu0 0.0
    %1688 = vmatpush1.msra.mxu0 0.0
    %1689 = vmatprep.subr.mxu0 0.0
    %1690 = vmatpush1.msra.mxu0 0.0
    %1691 = vmatprep.subr.mxu0 0.0
    %1692 = vmatpush1.msra.mxu0 0.0
    %1693 = vmatprep.subr.mxu0 0.0
    %1694 = vmatpush1.msra.mxu0 0.0
    %1695 = vmatprep.subr.mxu0 0.0
    %1696 = vmatpush1.msra.mxu0 0.0
    %1697 = vmatprep.subr.mxu0 0.0
    %1698 = vmatpush1.msra.mxu0 0.0
    %1699 = vmatprep.subr.mxu0 0.0
    %1700 = vmatpush1.msra.mxu0 %v1103
    %1701 = vmatprep.subr.mxu0 0.0
    %1702 = vmatpush1.msra.mxu0 %v1102
    %1703 = vmatprep.subr.mxu0 0.0
    %1704 = vmatpush1.msra.mxu0 %v1101
    %1705 = vmatprep.subr.mxu0 0.0
    %1706 = vmatpush1.msra.mxu0 %v1100
    %1707 = vmatprep.subr.mxu0 0.0
    %1708 = vmatpush2.msra.mxu0 0.0
    %1709 = vmatprep.subr.mxu0 0.0
    %1710 = vmatpush2.msra.mxu0 0.0
    %1711 = vmatprep.subr.mxu0 0.0
    %1712 = vmatpush2.msra.mxu0 0.0
    %1713 = vmatprep.subr.mxu0 0.0
    %1714 = vmatpush2.msra.mxu0 0.0
    %1715 = vmatprep.subr.mxu0 0.0
    %1716 = vmatpush2.msra.mxu0 0.0
    %1717 = vmatprep.subr.mxu0 0.0
    %1718 = vmatpush2.msra.mxu0 0.0
    %1719 = vmatprep.subr.mxu0 0.0
    %1720 = vmatpush2.msra.mxu0 0.0
    %1721 = vmatprep.subr.mxu0 0.0
    %1722 = vmatpush2.msra.mxu0 0.0
    %1723 = vmatprep.subr.mxu0 0.0
    %1724 = vmatpush2.msra.mxu0 0.0
    %1725 = vmatprep.subr.mxu0 0.0
    %1726 = vmatpush2.msra.mxu0 0.0
    %1727 = vmatprep.subr.mxu0 0.0
    %1728 = vmatpush2.msra.mxu0 0.0
    %1729 = vmatprep.subr.mxu0 0.0
    %1730 = vmatpush2.msra.mxu0 0.0
    %1731 = vmatprep.subr.mxu0 0.0
    %1732 = vmatpush2.msra.mxu0 0.0
    %1733 = vmatprep.subr.mxu0 0.0
    %1734 = vmatpush2.msra.mxu0 0.0
    %1735 = vmatprep.subr.mxu0 0.0
    %1736 = vmatpush2.msra.mxu0 0.0
    %1737 = vmatprep.subr.mxu0 0.0
    %1738 = vmatpush2.msra.mxu0 0.0
    %1739 = vmatprep.mubr.f32.mxu0 0.0
    %1740 = vmatmul.mubr.f32.gmra.mxu0 %v1673
    %v1741 = vpop.f32.mrf.mxu0
    %v1742 = vadd.f32 0.0, %v1741
    %v1743 = vpop.f32.mrf.mxu0
    %1744 = vdwg.mxu0
    %v1745 = vadd.f32 %v1230, %v1742
    %v1746 = vmul.f32 %v1745, 2.0
    %v1747 = vsel %vm86, %v1746, %v1745
    %v1748 = vxor.u32 %v1747, 2147483648
    %v1749 = vmul.f32 %v1748, 1.442695
    %v1750 = vpow.pop %v1749
    %v1751 = vadd.f32 %v1750, 1.0
    %v1752 = vrcp.pop %v1751
    %v1753 = vmul.f32 1.0, %v1752
    %v1754 = vmul.f32 %v1753, 2.0
    %v1755 = vsub.f32 %v1754, 1.0
    %v1756 = vsel %vm86, %v1755, %v1753
    %v1757 = vmul.f32 %v1756, %v1663
    %1759 = vrot.lane.b32.xlu0 %v1756, 64
    %v1760 = vpop.permute.xlu0 %1759
    %v1762 = vmul.f32 %v1756, %v1760
    %1764 = vrot.lane.b32.xlu0 %v1762, 32
    %v1765 = vpop.permute.xlu0 %1764
    %v1767 = vadd.f32 %v1757, %v1765
    %v1768 = vtanh.pop %v1767
    %1770 = vrot.lane.b32.xlu0 %v1768, 64
    %v1771 = vpop.permute.xlu0 %1770
    %v1773 = vmul.f32 %v1756, %v1771
    %1775 = vrot.lane.b32.xlu0 %v1773, 32
    %v1776 = vpop.permute.xlu0 %1775
    %v1777 = vsel %vm229, %v1776, 0
    %1779 = vmatprep.subr.mxu0 0.0
    %1780 = vmatpush1.msra.mxu0 0.0
    %1781 = vmatprep.subr.mxu0 0.0
    %1782 = vmatpush1.msra.mxu0 0.0
    %1783 = vmatprep.subr.mxu0 0.0
    %1784 = vmatpush1.msra.mxu0 0.0
    %1785 = vmatprep.subr.mxu0 0.0
    %1786 = vmatpush1.msra.mxu0 0.0
    %1787 = vmatprep.subr.mxu0 0.0
    %1788 = vmatpush1.msra.mxu0 0.0
    %1789 = vmatprep.subr.mxu0 0.0
    %1790 = vmatpush1.msra.mxu0 0.0
    %1791 = vmatprep.subr.mxu0 0.0
    %1792 = vmatpush1.msra.mxu0 0.0
    %1793 = vmatprep.subr.mxu0 0.0
    %1794 = vmatpush1.msra.mxu0 0.0
    %1795 = vmatprep.subr.mxu0 0.0
    %1796 = vmatpush1.msra.mxu0 0.0
    %1797 = vmatprep.subr.mxu0 0.0
    %1798 = vmatpush1.msra.mxu0 0.0
    %1799 = vmatprep.subr.mxu0 0.0
    %1800 = vmatpush1.msra.mxu0 0.0
    %1801 = vmatprep.subr.mxu0 0.0
    %1802 = vmatpush1.msra.mxu0 0.0
    %1803 = vmatprep.subr.mxu0 0.0
    %1804 = vmatpush1.msra.mxu0 %v1103
    %1805 = vmatprep.subr.mxu0 0.0
    %1806 = vmatpush1.msra.mxu0 %v1102
    %1807 = vmatprep.subr.mxu0 0.0
    %1808 = vmatpush1.msra.mxu0 %v1101
    %1809 = vmatprep.subr.mxu0 0.0
    %1810 = vmatpush1.msra.mxu0 %v1100
    %1811 = vmatprep.subr.mxu0 0.0
    %1812 = vmatpush2.msra.mxu0 0.0
    %1813 = vmatprep.subr.mxu0 0.0
    %1814 = vmatpush2.msra.mxu0 0.0
    %1815 = vmatprep.subr.mxu0 0.0
    %1816 = vmatpush2.msra.mxu0 0.0
    %1817 = vmatprep.subr.mxu0 0.0
    %1818 = vmatpush2.msra.mxu0 0.0
    %1819 = vmatprep.subr.mxu0 0.0
    %1820 = vmatpush2.msra.mxu0 0.0
    %1821 = vmatprep.subr.mxu0 0.0
    %1822 = vmatpush2.msra.mxu0 0.0
    %1823 = vmatprep.subr.mxu0 0.0
    %1824 = vmatpush2.msra.mxu0 0.0
    %1825 = vmatprep.subr.mxu0 0.0
    %1826 = vmatpush2.msra.mxu0 0.0
    %1827 = vmatprep.subr.mxu0 0.0
    %1828 = vmatpush2.msra.mxu0 0.0
    %1829 = vmatprep.subr.mxu0 0.0
    %1830 = vmatpush2.msra.mxu0 0.0
    %1831 = vmatprep.subr.mxu0 0.0
    %1832 = vmatpush2.msra.mxu0 0.0
    %1833 = vmatprep.subr.mxu0 0.0
    %1834 = vmatpush2.msra.mxu0 0.0
    %1835 = vmatprep.subr.mxu0 0.0
    %1836 = vmatpush2.msra.mxu0 0.0
    %1837 = vmatprep.subr.mxu0 0.0
    %1838 = vmatpush2.msra.mxu0 0.0
    %1839 = vmatprep.subr.mxu0 0.0
    %1840 = vmatpush2.msra.mxu0 0.0
    %1841 = vmatprep.subr.mxu0 0.0
    %1842 = vmatpush2.msra.mxu0 0.0
    %1843 = vmatprep.mubr.f32.mxu0 0.0
    %1844 = vmatmul.mubr.f32.gmra.mxu0 %v1777
    %v1845 = vpop.f32.mrf.mxu0
    %v1846 = vadd.f32 0.0, %v1845
    %v1847 = vpop.f32.mrf.mxu0
    %1848 = vdwg.mxu0
    %v1849 = vadd.f32 %v1235, %v1846
    %v1850 = vmul.f32 %v1849, 2.0
    %v1851 = vsel %vm86, %v1850, %v1849
    %v1852 = vxor.u32 %v1851, 2147483648
    %v1853 = vmul.f32 %v1852, 1.442695
    %v1854 = vpow.pop %v1853
    %v1855 = vadd.f32 %v1854, 1.0
    %v1856 = vrcp.pop %v1855
    %v1857 = vmul.f32 1.0, %v1856
    %v1858 = vmul.f32 %v1857, 2.0
    %v1859 = vsub.f32 %v1858, 1.0
    %v1860 = vsel %vm86, %v1859, %v1857
    %v1861 = vmul.f32 %v1860, %v1767
    %1863 = vrot.lane.b32.xlu0 %v1860, 64
    %v1864 = vpop.permute.xlu0 %1863
    %v1866 = vmul.f32 %v1860, %v1864
    %1868 = vrot.lane.b32.xlu0 %v1866, 32
    %v1869 = vpop.permute.xlu0 %1868
    %v1871 = vadd.f32 %v1861, %v1869
    %v1872 = vtanh.pop %v1871
    %1874 = vrot.lane.b32.xlu0 %v1872, 64
    %v1875 = vpop.permute.xlu0 %1874
    %v1877 = vmul.f32 %v1860, %v1875
    %1879 = vrot.lane.b32.xlu0 %v1877, 32
    %v1880 = vpop.permute.xlu0 %1879
    %v1881 = vsel %vm229, %v1880, 0
    %1883 = vmatprep.subr.mxu0 0.0
    %1884 = vmatpush1.msra.mxu0 0.0
    %1885 = vmatprep.subr.mxu0 0.0
    %1886 = vmatpush1.msra.mxu0 0.0
    %1887 = vmatprep.subr.mxu0 0.0
    %1888 = vmatpush1.msra.mxu0 0.0
    %1889 = vmatprep.subr.mxu0 0.0
    %1890 = vmatpush1.msra.mxu0 0.0
    %1891 = vmatprep.subr.mxu0 0.0
    %1892 = vmatpush1.msra.mxu0 0.0
    %1893 = vmatprep.subr.mxu0 0.0
    %1894 = vmatpush1.msra.mxu0 0.0
    %1895 = vmatprep.subr.mxu0 0.0
    %1896 = vmatpush1.msra.mxu0 0.0
    %1897 = vmatprep.subr.mxu0 0.0
    %1898 = vmatpush1.msra.mxu0 0.0
    %1899 = vmatprep.subr.mxu0 0.0
    %1900 = vmatpush1.msra.mxu0 0.0
    %1901 = vmatprep.subr.mxu0 0.0
    %1902 = vmatpush1.msra.mxu0 0.0
    %1903 = vmatprep.subr.mxu0 0.0
    %1904 = vmatpush1.msra.mxu0 0.0
    %1905 = vmatprep.subr.mxu0 0.0
    %1906 = vmatpush1.msra.mxu0 0.0
    %1907 = vmatprep.subr.mxu0 0.0
    %1908 = vmatpush1.msra.mxu0 %v1103
    %1909 = vmatprep.subr.mxu0 0.0
    %1910 = vmatpush1.msra.mxu0 %v1102
    %1911 = vmatprep.subr.mxu0 0.0
    %1912 = vmatpush1.msra.mxu0 %v1101
    %1913 = vmatprep.subr.mxu0 0.0
    %1914 = vmatpush1.msra.mxu0 %v1100
    %1915 = vmatprep.subr.mxu0 0.0
    %1916 = vmatpush2.msra.mxu0 0.0
    %1917 = vmatprep.subr.mxu0 0.0
    %1918 = vmatpush2.msra.mxu0 0.0
    %1919 = vmatprep.subr.mxu0 0.0
    %1920 = vmatpush2.msra.mxu0 0.0
    %1921 = vmatprep.subr.mxu0 0.0
    %1922 = vmatpush2.msra.mxu0 0.0
    %1923 = vmatprep.subr.mxu0 0.0
    %1924 = vmatpush2.msra.mxu0 0.0
    %1925 = vmatprep.subr.mxu0 0.0
    %1926 = vmatpush2.msra.mxu0 0.0
    %1927 = vmatprep.subr.mxu0 0.0
    %1928 = vmatpush2.msra.mxu0 0.0
    %1929 = vmatprep.subr.mxu0 0.0
    %1930 = vmatpush2.msra.mxu0 0.0
    %1931 = vmatprep.subr.mxu0 0.0
    %1932 = vmatpush2.msra.mxu0 0.0
    %1933 = vmatprep.subr.mxu0 0.0
    %1934 = vmatpush2.msra.mxu0 0.0
    %1935 = vmatprep.subr.mxu0 0.0
    %1936 = vmatpush2.msra.mxu0 0.0
    %1937 = vmatprep.subr.mxu0 0.0
    %1938 = vmatpush2.msra.mxu0 0.0
    %1939 = vmatprep.subr.mxu0 0.0
    %1940 = vmatpush2.msra.mxu0 0.0
    %1941 = vmatprep.subr.mxu0 0.0
    %1942 = vmatpush2.msra.mxu0 0.0
    %1943 = vmatprep.subr.mxu0 0.0
    %1944 = vmatpush2.msra.mxu0 0.0
    %1945 = vmatprep.subr.mxu0 0.0
    %1946 = vmatpush2.msra.mxu0 0.0
    %1947 = vmatprep.mubr.f32.mxu0 0.0
    %1948 = vmatmul.mubr.f32.gmra.mxu0 %v1881
    %v1949 = vpop.f32.mrf.mxu0
    %v1950 = vadd.f32 0.0, %v1949
    %v1951 = vpop.f32.mrf.mxu0
    %1952 = vdwg.mxu0
    %v1953 = vadd.f32 %v1240, %v1950
    %v1954 = vmul.f32 %v1953, 2.0
    %v1955 = vsel %vm86, %v1954, %v1953
    %v1956 = vxor.u32 %v1955, 2147483648
    %v1957 = vmul.f32 %v1956, 1.442695
    %v1958 = vpow.pop %v1957
    %v1959 = vadd.f32 %v1958, 1.0
    %v1960 = vrcp.pop %v1959
    %v1961 = vmul.f32 1.0, %v1960
    %v1962 = vmul.f32 %v1961, 2.0
    %v1963 = vsub.f32 %v1962, 1.0
    %v1964 = vsel %vm86, %v1963, %v1961
    %v1965 = vmul.f32 %v1964, %v1871
    %1967 = vrot.lane.b32.xlu0 %v1964, 64
    %v1968 = vpop.permute.xlu0 %1967
    %v1970 = vmul.f32 %v1964, %v1968
    %1972 = vrot.lane.b32.xlu0 %v1970, 32
    %v1973 = vpop.permute.xlu0 %1972
    %v1975 = vadd.f32 %v1965, %v1973
    %v1976 = vtanh.pop %v1975
    %1978 = vrot.lane.b32.xlu0 %v1976, 64
    %v1979 = vpop.permute.xlu0 %1978
    %v1981 = vmul.f32 %v1964, %v1979
    %1983 = vrot.lane.b32.xlu0 %v1981, 32
    %v1984 = vpop.permute.xlu0 %1983
    %v1985 = vsel %vm229, %v1984, 0
    %1987 = vmatprep.subr.mxu0 0.0
    %1988 = vmatpush1.msra.mxu0 0.0
    %1989 = vmatprep.subr.mxu0 0.0
    %1990 = vmatpush1.msra.mxu0 0.0
    %1991 = vmatprep.subr.mxu0 0.0
    %1992 = vmatpush1.msra.mxu0 0.0
    %1993 = vmatprep.subr.mxu0 0.0
    %1994 = vmatpush1.msra.mxu0 0.0
    %1995 = vmatprep.subr.mxu0 0.0
    %1996 = vmatpush1.msra.mxu0 0.0
    %1997 = vmatprep.subr.mxu0 0.0
    %1998 = vmatpush1.msra.mxu0 0.0
    %1999 = vmatprep.subr.mxu0 0.0
    %2000 = vmatpush1.msra.mxu0 0.0
    %2001 = vmatprep.subr.mxu0 0.0
    %2002 = vmatpush1.msra.mxu0 0.0
    %2003 = vmatprep.subr.mxu0 0.0
    %2004 = vmatpush1.msra.mxu0 0.0
    %2005 = vmatprep.subr.mxu0 0.0
    %2006 = vmatpush1.msra.mxu0 0.0
    %2007 = vmatprep.subr.mxu0 0.0
    %2008 = vmatpush1.msra.mxu0 0.0
    %2009 = vmatprep.subr.mxu0 0.0
    %2010 = vmatpush1.msra.mxu0 0.0
    %2011 = vmatprep.subr.mxu0 0.0
    %2012 = vmatpush1.msra.mxu0 %v1103
    %2013 = vmatprep.subr.mxu0 0.0
    %2014 = vmatpush1.msra.mxu0 %v1102
    %2015 = vmatprep.subr.mxu0 0.0
    %2016 = vmatpush1.msra.mxu0 %v1101
    %2017 = vmatprep.subr.mxu0 0.0
    %2018 = vmatpush1.msra.mxu0 %v1100
    %2019 = vmatprep.subr.mxu0 0.0
    %2020 = vmatpush2.msra.mxu0 0.0
    %2021 = vmatprep.subr.mxu0 0.0
    %2022 = vmatpush2.msra.mxu0 0.0
    %2023 = vmatprep.subr.mxu0 0.0
    %2024 = vmatpush2.msra.mxu0 0.0
    %2025 = vmatprep.subr.mxu0 0.0
    %2026 = vmatpush2.msra.mxu0 0.0
    %2027 = vmatprep.subr.mxu0 0.0
    %2028 = vmatpush2.msra.mxu0 0.0
    %2029 = vmatprep.subr.mxu0 0.0
    %2030 = vmatpush2.msra.mxu0 0.0
    %2031 = vmatprep.subr.mxu0 0.0
    %2032 = vmatpush2.msra.mxu0 0.0
    %2033 = vmatprep.subr.mxu0 0.0
    %2034 = vmatpush2.msra.mxu0 0.0
    %2035 = vmatprep.subr.mxu0 0.0
    %2036 = vmatpush2.msra.mxu0 0.0
    %2037 = vmatprep.subr.mxu0 0.0
    %2038 = vmatpush2.msra.mxu0 0.0
    %2039 = vmatprep.subr.mxu0 0.0
    %2040 = vmatpush2.msra.mxu0 0.0
    %2041 = vmatprep.subr.mxu0 0.0
    %2042 = vmatpush2.msra.mxu0 0.0
    %2043 = vmatprep.subr.mxu0 0.0
    %2044 = vmatpush2.msra.mxu0 0.0
    %2045 = vmatprep.subr.mxu0 0.0
    %2046 = vmatpush2.msra.mxu0 0.0
    %2047 = vmatprep.subr.mxu0 0.0
    %2048 = vmatpush2.msra.mxu0 0.0
    %2049 = vmatprep.subr.mxu0 0.0
    %2050 = vmatpush2.msra.mxu0 0.0
    %2051 = vmatprep.mubr.f32.mxu0 0.0
    %2052 = vmatmul.mubr.f32.gmra.mxu0 %v1985
    %v2053 = vpop.f32.mrf.mxu0
    %v2054 = vadd.f32 0.0, %v2053
    %v2055 = vpop.f32.mrf.mxu0
    %2056 = vdwg.mxu0
    %v2057 = vadd.f32 %v1245, %v2054
    %v2058 = vmul.f32 %v2057, 2.0
    %v2059 = vsel %vm86, %v2058, %v2057
    %v2060 = vxor.u32 %v2059, 2147483648
    %v2061 = vmul.f32 %v2060, 1.442695
    %v2062 = vpow.pop %v2061
    %v2063 = vadd.f32 %v2062, 1.0
    %v2064 = vrcp.pop %v2063
    %v2065 = vmul.f32 1.0, %v2064
    %v2066 = vmul.f32 %v2065, 2.0
    %v2067 = vsub.f32 %v2066, 1.0
    %v2068 = vsel %vm86, %v2067, %v2065
    %v2069 = vmul.f32 %v2068, %v1975
    %2071 = vrot.lane.b32.xlu0 %v2068, 64
    %v2072 = vpop.permute.xlu0 %2071
    %v2074 = vmul.f32 %v2068, %v2072
    %2076 = vrot.lane.b32.xlu0 %v2074, 32
    %v2077 = vpop.permute.xlu0 %2076
    %v2079 = vadd.f32 %v2069, %v2077
    %v2080 = vtanh.pop %v2079
    %2082 = vrot.lane.b32.xlu0 %v2080, 64
    %v2083 = vpop.permute.xlu0 %2082
    %v2085 = vmul.f32 %v2068, %v2083
    %2087 = vrot.lane.b32.xlu0 %v2085, 32
    %v2088 = vpop.permute.xlu0 %2087
    %s2090 = scalar_lea.vmem %s12, 8
    %2091 = vst.msk [vmem:[%s2090] sm:$0xff] %vm229, %v2088
    %2093 = vrot.lane.b32.xlu0 %v2079, 96
    %v2094 = vpop.permute.xlu0 %2093
    %s2096 = scalar_lea.vmem %s13, 8
    %2097 = vst.msk [vmem:[%s2096] sm:$0xff] %vm229, %v2094
    %v2098 = vld [vmem:[#allocation7] sm:$0xff]
    %v2099 = vld [vmem:[#allocation7 + $0x8] sm:$0xff]
    %v2100 = vld [vmem:[#allocation7 + $0x10] sm:$0xff]
    %v2101 = vld [vmem:[#allocation7 + $0x18] sm:$0xff]
    %v2102 = vld [vmem:[%s10] sm:$0x1]
    %v2104 = vlaneseq
    %v2105 = vshrl.u32 %v2104, 7
    %v2106 = vsub.s32 0, %v2105
    %v2107 = vrot.slane %v2102, %v2106
    %v2109 = vsel %vm229, %v2088, 0
    %2111 = vmatprep.subr.mxu0 0.0
    %2112 = vmatpush1.msra.mxu0 0.0
    %2113 = vmatprep.subr.mxu0 0.0
    %2114 = vmatpush1.msra.mxu0 0.0
    %2115 = vmatprep.subr.mxu0 0.0
    %2116 = vmatpush1.msra.mxu0 0.0
    %2117 = vmatprep.subr.mxu0 0.0
    %2118 = vmatpush1.msra.mxu0 0.0
    %2119 = vmatprep.subr.mxu0 0.0
    %2120 = vmatpush1.msra.mxu0 0.0
    %2121 = vmatprep.subr.mxu0 0.0
    %2122 = vmatpush1.msra.mxu0 0.0
    %2123 = vmatprep.subr.mxu0 0.0
    %2124 = vmatpush1.msra.mxu0 0.0
    %2125 = vmatprep.subr.mxu0 0.0
    %2126 = vmatpush1.msra.mxu0 0.0
    %2127 = vmatprep.subr.mxu0 0.0
    %2128 = vmatpush1.msra.mxu0 0.0
    %2129 = vmatprep.subr.mxu0 0.0
    %2130 = vmatpush1.msra.mxu0 0.0
    %2131 = vmatprep.subr.mxu0 0.0
    %2132 = vmatpush1.msra.mxu0 0.0
    %2133 = vmatprep.subr.mxu0 0.0
    %2134 = vmatpush1.msra.mxu0 0.0
    %2135 = vmatprep.subr.mxu0 0.0
    %2136 = vmatpush1.msra.mxu0 %v2101
    %2137 = vmatprep.subr.mxu0 0.0
    %2138 = vmatpush1.msra.mxu0 %v2100
    %2139 = vmatprep.subr.mxu0 0.0
    %2140 = vmatpush1.msra.mxu0 %v2099
    %2141 = vmatprep.subr.mxu0 0.0
    %2142 = vmatpush1.msra.mxu0 %v2098
    %2143 = vmatprep.subr.mxu0 0.0
    %2144 = vmatpush2.msra.mxu0 0.0
    %2145 = vmatprep.subr.mxu0 0.0
    %2146 = vmatpush2.msra.mxu0 0.0
    %2147 = vmatprep.subr.mxu0 0.0
    %2148 = vmatpush2.msra.mxu0 0.0
    %2149 = vmatprep.subr.mxu0 0.0
    %2150 = vmatpush2.msra.mxu0 0.0
    %2151 = vmatprep.subr.mxu0 0.0
    %2152 = vmatpush2.msra.mxu0 0.0
    %2153 = vmatprep.subr.mxu0 0.0
    %2154 = vmatpush2.msra.mxu0 0.0
    %2155 = vmatprep.subr.mxu0 0.0
    %2156 = vmatpush2.msra.mxu0 0.0
    %2157 = vmatprep.subr.mxu0 0.0
    %2158 = vmatpush2.msra.mxu0 0.0
    %2159 = vmatprep.subr.mxu0 0.0
    %2160 = vmatpush2.msra.mxu0 0.0
    %2161 = vmatprep.subr.mxu0 0.0
    %2162 = vmatpush2.msra.mxu0 0.0
    %2163 = vmatprep.subr.mxu0 0.0
    %2164 = vmatpush2.msra.mxu0 0.0
    %2165 = vmatprep.subr.mxu0 0.0
    %2166 = vmatpush2.msra.mxu0 0.0
    %2167 = vmatprep.subr.mxu0 0.0
    %2168 = vmatpush2.msra.mxu0 0.0
    %2169 = vmatprep.subr.mxu0 0.0
    %2170 = vmatpush2.msra.mxu0 0.0
    %2171 = vmatprep.subr.mxu0 0.0
    %2172 = vmatpush2.msra.mxu0 0.0
    %2173 = vmatprep.subr.mxu0 0.0
    %2174 = vmatpush2.msra.mxu0 0.0
    %2175 = vmatprep.mubr.f32.mxu0 0.0
    %2176 = vmatmul.mubr.f32.gmra.mxu0 %v2109
    %v2177 = vpop.f32.mrf.mxu0
    %v2178 = vadd.f32 %v2107, %v2177
    %v2179 = vpop.f32.mrf.mxu0
    %2180 = vdwg.mxu0
    %2181 = vst [vmem:[%s11] sm:$0xff] %v2178
    // Predicated region
    $region58: #{text_generator_forward.1} parent=1 // pred_check
      _
    $region59: #{text_generator_forward.1} parent=1 // pred_check_branch
      %2183 = sbr.rel (0) target = $region61
    $region60: #{text_generator_forward.1} parent=1 // pred_region
      _
    $region61: #{text_generator_forward.1} parent=1 // pred_fallthru
      _
    // Predicated region
    $region62: #{text_generator_forward.1} parent=1 // pred_check
      _
    $region63: #{text_generator_forward.1} parent=1 // pred_check_branch
      %2185 = sbr.rel (0) target = $region65
    $region64: #{text_generator_forward.1} parent=1 // pred_region
      _
    $region65: #{text_generator_forward.1} parent=1 // pred_fallthru
      _
    // Predicated region
    $region66: #{text_generator_forward.1} parent=1 // pred_check
      _
    $region67: #{text_generator_forward.1} parent=1 // pred_check_branch
      %2187 = sbr.rel (0) target = $region69
    $region68: #{text_generator_forward.1} parent=1 // pred_region
      _
    $region69: #{text_generator_forward.1} parent=1 // pred_fallthru
      _
    // Predicated region
    $region70: #{text_generator_forward.1} parent=1 // pred_check
      _
    $region71: #{text_generator_forward.1} parent=1 // pred_check_branch
      %2189 = sbr.rel (0) target = $region73
    $region72: #{text_generator_forward.1} parent=1 // pred_region
      _
    $region73: #{text_generator_forward.1} parent=1 // pred_fallthru
      _
    // Predicated region
    $region74: #{text_generator_forward.1} parent=1 // pred_check
      _
    $region75: #{text_generator_forward.1} parent=1 // pred_check_branch
      %2191 = sbr.rel (0) target = $region77
    $region76: #{text_generator_forward.1} parent=1 // pred_region
      _
    $region77: #{text_generator_forward.1} parent=1 // pred_fallthru
      _
    // Predicated region
    $region78: #{text_generator_forward.1} parent=1 // pred_check
      _
    $region79: #{text_generator_forward.1} parent=1 // pred_check_branch
      %2193 = sbr.rel (0) target = $region81
    $region80: #{text_generator_forward.1} parent=1 // pred_region
      _
    $region81: #{text_generator_forward.1} parent=1 // pred_fallthru
      _
    %2194 = vsyncpa [#allocation4], 1
    %2195 = vsyncpa [#allocation6], 1

</llo_original>
